<compile_context>
chip_gen: v5e
topology: v5e:2x2
jax: 0.10.0
libtpu: 0.0.40
codegen_flags: <defaults>
</compile_context>

<pallas_src>
import jax
import jax.numpy as jnp
from jax.experimental import pallas as pl
from jax.experimental.pallas import tpu as pltpu


# --------------------------------------------------------------------------
# Row-tile selection: pick big blocks (each grid step costs ~0.35 us of fixed
# overhead), but keep >= 2 parallel blocks when that is free so v7x's two
# TensorCores are both used.  The returned tile always divides T exactly.
# --------------------------------------------------------------------------

def _row_tile(T, cap=512):
    best = None
    for tm in range(min(T, cap), 7, -1):
        if T % tm == 0 and tm % 8 == 0:
            best = tm
            break
    if best is None:
        return T                      # single full-extent block (always legal)
    if best == T and T % 16 == 0:
        return T // 2                 # 2 parallel blocks for v7x megacore
    return best


# --------------------------------------------------------------------------
# Kernel 1: q = src + pos; value = src @ Wv + bv;
#           [offsets | attn_logits] = q @ [W_off | W_aw] + [b_off | b_aw];
#           attn = grouped softmax(attn_logits) over (n_levels*n_points) per head.
# --------------------------------------------------------------------------

def pallas_proj_softmax(sf, pf, wv, bv, woa, boa, n_heads, lp):
    T, Dm = sf.shape
    n_oa = woa.shape[1]
    n_aw = n_heads * lp
    n_off = n_oa - n_aw
    tm = _row_tile(T)
    assert T % tm == 0
    bv2 = bv.reshape(1, Dm)
    boa2 = boa.reshape(1, n_oa)

    def kernel(s_ref, p_ref, wv_ref, bv_ref, woa_ref, boa_ref,
               val_ref, off_ref, aw_ref):
        s = s_ref[...]
        q = s + p_ref[...]
        val_ref[...] = (jnp.dot(s, wv_ref[...],
                                preferred_element_type=jnp.float32)
                        + bv_ref[...]).astype(val_ref.dtype)
        oa = (jnp.dot(q, woa_ref[...], preferred_element_type=jnp.float32)
              + boa_ref[...])
        off_ref[...] = oa[:, :n_off].astype(off_ref.dtype)
        logits = oa[:, n_off:]                        # (tm, n_heads*lp), lane-dense
        parts = []
        for h in range(n_heads):                      # grouped softmax per head
            lg = logits[:, h * lp:(h + 1) * lp]
            m = jnp.max(lg, axis=-1, keepdims=True)
            e = jnp.exp(lg - m)
            parts.append(e / jnp.sum(e, axis=-1, keepdims=True))
        aw_ref[...] = jnp.concatenate(parts, axis=-1).astype(aw_ref.dtype)

    return pl.pallas_call(
        kernel,
        out_shape=(jax.ShapeDtypeStruct((T, Dm), sf.dtype),
                   jax.ShapeDtypeStruct((T, n_off), sf.dtype),
                   jax.ShapeDtypeStruct((T, n_aw), sf.dtype)),
        grid_spec=pltpu.PrefetchScalarGridSpec(
            num_scalar_prefetch=0,
            grid=(T // tm,),
            in_specs=[
                pl.BlockSpec((tm, Dm), lambda i: (i, 0)),
                pl.BlockSpec((tm, Dm), lambda i: (i, 0)),
                pl.BlockSpec((Dm, Dm), lambda i: (0, 0)),
                pl.BlockSpec((1, Dm), lambda i: (0, 0)),
                pl.BlockSpec((Dm, n_oa), lambda i: (0, 0)),
                pl.BlockSpec((1, n_oa), lambda i: (0, 0)),
            ],
            out_specs=[
                pl.BlockSpec((tm, Dm), lambda i: (i, 0)),
                pl.BlockSpec((tm, n_off), lambda i: (i, 0)),
                pl.BlockSpec((tm, n_aw), lambda i: (i, 0)),
            ],
        ),
        compiler_params=pltpu.CompilerParams(dimension_semantics=("parallel",)),
    )(sf, pf, wv, bv2, woa, boa2)


# --------------------------------------------------------------------------
# Kernel 2: LayerNorm(res + (a @ W_out + b_out))        (eps=1e-5, nn.LayerNorm)
# --------------------------------------------------------------------------

def pallas_out_proj_add_layernorm(a, res, w, b, gamma, beta, eps=1e-5):
    T, Dm = a.shape
    tm = _row_tile(T)
    assert T % tm == 0
    b2 = b.reshape(1, Dm)
    g2 = gamma.reshape(1, Dm)
    be2 = beta.reshape(1, Dm)

    def kernel(a_ref, r_ref, w_ref, b_ref, g_ref, be_ref, o_ref):
        y = (jnp.dot(a_ref[...], w_ref[...], preferred_element_type=jnp.float32)
             + b_ref[...] + r_ref[...])
        mu = jnp.mean(y, axis=-1, keepdims=True)
        var = jnp.mean((y - mu) ** 2, axis=-1, keepdims=True)
        o_ref[...] = ((y - mu) * jax.lax.rsqrt(var + eps) * g_ref[...]
                      + be_ref[...]).astype(o_ref.dtype)

    return pl.pallas_call(
        kernel,
        out_shape=jax.ShapeDtypeStruct((T, Dm), a.dtype),
        grid_spec=pltpu.PrefetchScalarGridSpec(
            num_scalar_prefetch=0,
            grid=(T // tm,),
            in_specs=[
                pl.BlockSpec((tm, Dm), lambda i: (i, 0)),
                pl.BlockSpec((tm, Dm), lambda i: (i, 0)),
                pl.BlockSpec((Dm, Dm), lambda i: (0, 0)),
                pl.BlockSpec((1, Dm), lambda i: (0, 0)),
                pl.BlockSpec((1, Dm), lambda i: (0, 0)),
                pl.BlockSpec((1, Dm), lambda i: (0, 0)),
            ],
            out_specs=pl.BlockSpec((tm, Dm), lambda i: (i, 0)),
        ),
        compiler_params=pltpu.CompilerParams(dimension_semantics=("parallel",)),
    )(a, res, w, b2, g2, be2)


# --------------------------------------------------------------------------
# Kernel 3: FFN + residual + LayerNorm2, fully fused.
#           y = LayerNorm(x + (act(x @ W1 + b1) @ W2 + b2))
# --------------------------------------------------------------------------

def pallas_ffn_add_layernorm(x, w1, b1, w2, b2, gamma, beta,
                             activation="relu", eps=1e-5):
    T, Dm = x.shape
    Dff = w1.shape[1]
    tm = _row_tile(T)
    assert T % tm == 0
    b1_2 = b1.reshape(1, Dff)
    b2_2 = b2.reshape(1, Dm)
    g2 = gamma.reshape(1, Dm)
    be2 = beta.reshape(1, Dm)

    def kernel(x_ref, w1_ref, b1_ref, w2_ref, b2_ref, g_ref, be_ref, o_ref):
        xv = x_ref[...]
        h = (jnp.dot(xv, w1_ref[...], preferred_element_type=jnp.float32)
             + b1_ref[...])
        if activation == "relu":
            h = jnp.maximum(h, 0.0)
        elif activation == "gelu":
            h = jax.nn.gelu(h)
        # TODO(synk): 'glu' activation (halves d_ffn) not implemented; the
        # reference configuration uses 'relu'.
        y = (xv
             + jnp.dot(h.astype(xv.dtype), w2_ref[...],
                       preferred_element_type=jnp.float32)
             + b2_ref[...])
        mu = jnp.mean(y, axis=-1, keepdims=True)
        var = jnp.mean((y - mu) ** 2, axis=-1, keepdims=True)
        o_ref[...] = ((y - mu) * jax.lax.rsqrt(var + eps) * g_ref[...]
                      + be_ref[...]).astype(o_ref.dtype)

    return pl.pallas_call(
        kernel,
        out_shape=jax.ShapeDtypeStruct((T, Dm), x.dtype),
        grid_spec=pltpu.PrefetchScalarGridSpec(
            num_scalar_prefetch=0,
            grid=(T // tm,),
            in_specs=[
                pl.BlockSpec((tm, Dm), lambda i: (i, 0)),
                pl.BlockSpec((Dm, Dff), lambda i: (0, 0)),
                pl.BlockSpec((1, Dff), lambda i: (0, 0)),
                pl.BlockSpec((Dff, Dm), lambda i: (0, 0)),
                pl.BlockSpec((1, Dm), lambda i: (0, 0)),
                pl.BlockSpec((1, Dm), lambda i: (0, 0)),
                pl.BlockSpec((1, Dm), lambda i: (0, 0)),
            ],
            out_specs=pl.BlockSpec((tm, Dm), lambda i: (i, 0)),
        ),
        compiler_params=pltpu.CompilerParams(dimension_semantics=("parallel",)),
    )(x, w1, b1_2, w2, b2_2, g2, be2)


# --------------------------------------------------------------------------
# Plain-JAX glue: bilinear sampling (== F.grid_sample bilinear/zeros/
# align_corners=False) with the per-head weighted sum folded in.
# TODO(synk): data-dependent bilinear gather kept in plain JAX glue.
# --------------------------------------------------------------------------

def _grid_sample_bilinear_zeros(value_l, grid):
    """value_l: (B, C, H, W); grid: (B, Lq, P, 2) in [-1,1] with (x, y) order.
    Returns (B, C, Lq, P)."""
    B, C, H, W = value_l.shape
    x = ((grid[..., 0] + 1.0) * W - 1.0) * 0.5
    y = ((grid[..., 1] + 1.0) * H - 1.0) * 0.5
    x0 = jnp.floor(x)
    y0 = jnp.floor(y)
    x1 = x0 + 1.0
    y1 = y0 + 1.0
    wx1 = x - x0
    wx0 = 1.0 - wx1
    wy1 = y - y0
    wy0 = 1.0 - wy1
    vflat = value_l.reshape(B, C, H * W)

    def corner(ix, iy, wgt):
        inb = ((ix >= 0) & (ix <= W - 1) & (iy >= 0) & (iy <= H - 1)).astype(value_l.dtype)
        ixc = jnp.clip(ix, 0, W - 1).astype(jnp.int32)
        iyc = jnp.clip(iy, 0, H - 1).astype(jnp.int32)
        flat = (iyc * W + ixc).reshape(B, -1)                       # (B, Lq*P)
        g = jax.vmap(lambda vb, fb: jnp.take(vb, fb, axis=1))(vflat, flat)
        g = g.reshape(B, C, *ix.shape[1:])                          # (B, C, Lq, P)
        return g * (wgt * inb)[:, None]

    return (corner(x0, y0, wx0 * wy0) + corner(x1, y0, wx1 * wy0)
            + corner(x0, y1, wx0 * wy1) + corner(x1, y1, wx1 * wy1))


def _sample_and_aggregate(value_heads, aw, grids, spatial_shapes_py):
    """value_heads: (N, sum(H*W), M, Dh); aw: (N, Lq, M, Lv, P);
    grids: (N, Lq, M, Lv, P, 2) in [-1,1].  Returns (N, Lq, M*Dh)."""
    N, _, M, Dh = value_heads.shape
    Lq = aw.shape[1]
    out = jnp.zeros((N * M, Dh, Lq), value_heads.dtype)
    start = 0
    for lid, (H_, W_) in enumerate(spatial_shapes_py):
        hw = H_ * W_
        v_l = value_heads[:, start:start + hw]                      # (N, hw, M, Dh)
        v_l = jnp.transpose(v_l, (0, 2, 3, 1)).reshape(N * M, Dh, H_, W_)
        g_l = jnp.transpose(grids[:, :, :, lid], (0, 2, 1, 3, 4)).reshape(N * M, Lq, P_GLOBAL[0], 2) \
            if False else jnp.transpose(grids[:, :, :, lid], (0, 2, 1, 3, 4)).reshape(N * M, Lq, grids.shape[4], 2)
        sampled = _grid_sample_bilinear_zeros(v_l, g_l)             # (N*M, Dh, Lq, P)
        w_l = jnp.transpose(aw[:, :, :, lid, :], (0, 2, 1, 3)).reshape(N * M, 1, Lq, aw.shape[-1])
        out = out + jnp.sum(sampled * w_l, axis=-1)                 # (N*M, Dh, Lq)
        start += hw
    out = out.reshape(N, M, Dh, Lq)
    return jnp.transpose(out, (0, 3, 1, 2)).reshape(N, Lq, M * Dh)


P_GLOBAL = (0,)  # unused placeholder (kept to avoid accidental NameError in dead branch)


# --------------------------------------------------------------------------
# EncoderLayer forward (ops injected: Pallas kernels or pure-JAX reference)
# --------------------------------------------------------------------------

def encoder_layer(params, src, pos, reference_points, spatial_shapes_py,
                  level_start_index, cfg, ops, activation="relu"):
    del level_start_index  # level starts are derived from spatial_shapes_py
    N, Lq, Dm = src.shape
    M, Lv, P = cfg["n_heads"], cfg["n_levels"], cfg["n_points"]
    Dh = Dm // M
    LP = Lv * P
    T = N * Lq
    sf = src.reshape(T, Dm)
    pf = pos.reshape(T, Dm)

    # ---- MSDeformAttn: fused (pos-add, value / offsets / softmaxed weights) ----
    value, off, aw = ops["proj_softmax"](sf, pf,
                                         params["value_w"], params["value_b"],
                                         params["offaw_w"], params["offaw_b"],
                                         M, LP)

    off = off.reshape(N, Lq, M, Lv, P, 2)
    aw = aw.reshape(N, Lq, M, Lv, P)
    shapes = jnp.asarray(spatial_shapes_py, jnp.float32)            # (Lv, 2) = (H, W)
    offset_normalizer = jnp.stack([shapes[:, 1], shapes[:, 0]], -1) # (Lv, 2) = (W, H)
    loc = (reference_points[:, :, None, :, None, :]
           + off / offset_normalizer[None, None, None, :, None, :])
    grids = 2.0 * loc - 1.0                                         # (N, Lq, M, Lv, P, 2)

    value_heads = value.reshape(N, Lq, M, Dh)
    attn = _sample_and_aggregate(value_heads, aw, grids, spatial_shapes_py)  # (N, Lq, Dm)

    # ---- output projection + residual + LayerNorm1 (dropout1 p=0) ----
    x = ops["out_ln"](attn.reshape(T, Dm), sf,
                      params["out_w"], params["out_b"],
                      params["ln1_g"], params["ln1_b"])

    # ---- FFN + residual + LayerNorm2 (dropout2/3 p=0), activation='relu' ----
    x = ops["ffn_ln"](x, params["fc1_w"], params["fc1_b"],
                      params["fc2_w"], params["fc2_b"],
                      params["ln2_g"], params["ln2_b"], activation)
    return x.reshape(N, Lq, Dm)


# --------------------------------------------------------------------------
# Pure-JAX reference ops (for numerical cross-check)
# --------------------------------------------------------------------------

def jnp_proj_softmax(sf, pf, wv, bv, woa, boa, n_heads, lp):
    hp = jax.lax.Precision.HIGHEST
    value = jnp.dot(sf, wv, precision=hp) + bv
    q = sf + pf
    oa = jnp.dot(q, woa, precision=hp) + boa
    n_off = oa.shape[1] - n_heads * lp
    off = oa[:, :n_off]
    logits = oa[:, n_off:].reshape(-1, n_heads, lp)
    aw = jax.nn.softmax(logits, axis=-1).reshape(-1, n_heads * lp)
    return value, off, aw


def jnp_out_ln(a, r, w, b, g, be, eps=1e-5):
    y = jnp.dot(a, w, precision=jax.lax.Precision.HIGHEST) + b + r
    mu = jnp.mean(y, -1, keepdims=True)
    var = jnp.mean((y - mu) ** 2, -1, keepdims=True)
    return (y - mu) * jax.lax.rsqrt(var + eps) * g + be


def jnp_ffn_ln(x, w1, b1, w2, b2, g, be, activation="relu", eps=1e-5):
    hp = jax.lax.Precision.HIGHEST
    h = jnp.dot(x, w1, precision=hp) + b1
    if activation == "relu":
        h = jnp.maximum(h, 0.0)
    elif activation == "gelu":
        h = jax.nn.gelu(h)
    y = x + jnp.dot(h, w2, precision=hp) + b2
    mu = jnp.mean(y, -1, keepdims=True)
    var = jnp.mean((y - mu) ** 2, -1, keepdims=True)
    return (y - mu) * jax.lax.rsqrt(var + eps) * g + be


pallas_ops = dict(proj_softmax=pallas_proj_softmax,
                  out_ln=pallas_out_proj_add_layernorm,
                  ffn_ln=pallas_ffn_add_layernorm)
ref_ops = dict(proj_softmax=jnp_proj_softmax,
               out_ln=jnp_out_ln,
               ffn_ln=jnp_ffn_ln)


# --------------------------------------------------------------------------
# Deterministic parameter init
# --------------------------------------------------------------------------

def init_params(key, d_model, d_ffn, n_heads, n_levels, n_points):
    ks = jax.random.split(key, 6)

    def lin(k, fin, fout, scale=0.05):
        kw, kb = jax.random.split(k)
        return (scale * jax.random.normal(kw, (fin, fout), jnp.float32),
                scale * jax.random.normal(kb, (fout,), jnp.float32))

    p = {}
    p["value_w"], p["value_b"] = lin(ks[0], d_model, d_model)
    off_w, off_b = lin(ks[1], d_model, n_heads * n_levels * n_points * 2, 0.02)
    aw_w, aw_b = lin(ks[2], d_model, n_heads * n_levels * n_points)
    # Offsets + attention-weight projections fused along N (single matmul).
    p["offaw_w"] = jnp.concatenate([off_w, aw_w], axis=1)
    p["offaw_b"] = jnp.concatenate([off_b, aw_b], axis=0)
    p["out_w"], p["out_b"] = lin(ks[3], d_model, d_model)
    p["ln1_g"] = jnp.ones((d_model,), jnp.float32)
    p["ln1_b"] = jnp.zeros((d_model,), jnp.float32)
    p["fc1_w"], p["fc1_b"] = lin(ks[4], d_model, d_ffn)
    p["fc2_w"], p["fc2_b"] = lin(ks[5], d_ffn, d_model)
    p["ln2_g"] = jnp.ones((d_model,), jnp.float32)
    p["ln2_b"] = jnp.zeros((d_model,), jnp.float32)
    return p


# --------------------------------------------------------------------------

if __name__ == "__main__":
    d_model, d_ffn = 32, 64
    n_levels, n_heads, n_points = 2, 4, 4
    spatial_shapes_py = [(8, 8), (4, 4)]
    Lq = sum(h * w for h, w in spatial_shapes_py)   # 80
    N = 2
    cfg = dict(n_heads=n_heads, n_levels=n_levels, n_points=n_points)

    key = jax.random.PRNGKey(0)
    kp, ksrc, kpos, kref = jax.random.split(key, 4)
    params = init_params(kp, d_model, d_ffn, n_heads, n_levels, n_points)
    src = jax.random.normal(ksrc, (N, Lq, d_model), jnp.float32)
    pos = jax.random.normal(kpos, (N, Lq, d_model), jnp.float32)
    reference_points = jax.random.uniform(kref, (N, Lq, n_levels, 2), jnp.float32)

    starts = [0]
    for h, w in spatial_shapes_py[:-1]:
        starts.append(starts[-1] + h * w)
    level_start_index = jnp.asarray(starts, jnp.int32)
    spatial_shapes = jnp.asarray(spatial_shapes_py, jnp.int32)  # mirrors torch input

    out = encoder_layer(params, src, pos, reference_points, spatial_shapes_py,
                        level_start_index, cfg, pallas_ops)
    out = jax.block_until_ready(out)

    ref = encoder_layer(params, src, pos, reference_points, spatial_shapes_py,
                        level_start_index, cfg, ref_ops)
    ref = jax.block_until_ready(ref)

    assert out.shape == (N, Lq, d_model)
    assert bool(jnp.all(jnp.isfinite(out)))
    max_err = float(jnp.max(jnp.abs(out - ref)))
    assert max_err < 1e-3, f"mismatch vs pure-JAX reference: {max_err}"
    print("KERNEL_OK")
</pallas_src>

<mosaic_0001>
module attributes {stable_mosaic.version = 11 : i64} {
  func.func @kernel(%arg0: i32, %arg1: memref<80x32xf32, #tpu.memory_space<vmem>>, %arg2: memref<80x32xf32, #tpu.memory_space<vmem>>, %arg3: memref<32x32xf32, #tpu.memory_space<vmem>>, %arg4: memref<1x32xf32, #tpu.memory_space<vmem>>, %arg5: memref<32x96xf32, #tpu.memory_space<vmem>>, %arg6: memref<1x96xf32, #tpu.memory_space<vmem>>, %arg7: memref<80x32xf32, #tpu.memory_space<vmem>>, %arg8: memref<80x64xf32, #tpu.memory_space<vmem>>, %arg9: memref<80x32xf32, #tpu.memory_space<vmem>>) attributes {dimension_semantics = [#tpu.dimension_semantics<parallel>], iteration_bounds = array<i64: 2>, scalar_prefetch = 0 : i64, scratch_operands = 0 : i64, tpu.core_type = #tpu.core_type<tc>, window_params = [{transform_indices = @transform_0, window_bounds = array<i64: 80, 32>}, {transform_indices = @transform_1, window_bounds = array<i64: 80, 32>}, {pipeline_mode = #tpu.pipeline_mode<synchronous>, transform_indices = @transform_2, window_bounds = array<i64: 32, 32>}, {pipeline_mode = #tpu.pipeline_mode<synchronous>, transform_indices = @transform_3, window_bounds = array<i64: 1, 32>}, {pipeline_mode = #tpu.pipeline_mode<synchronous>, transform_indices = @transform_4, window_bounds = array<i64: 32, 96>}, {pipeline_mode = #tpu.pipeline_mode<synchronous>, transform_indices = @transform_5, window_bounds = array<i64: 1, 96>}, {transform_indices = @transform_6, window_bounds = array<i64: 80, 32>}, {transform_indices = @transform_7, window_bounds = array<i64: 80, 64>}, {transform_indices = @transform_8, window_bounds = array<i64: 80, 32>}]} {
    %c0 = arith.constant 0 : index
    %c0_0 = arith.constant 0 : index
    %0 = vector.load %arg1[%c0, %c0_0] : memref<80x32xf32, #tpu.memory_space<vmem>>, vector<80x32xf32>
    %c0_1 = arith.constant 0 : index
    %c0_2 = arith.constant 0 : index
    %1 = vector.load %arg2[%c0_1, %c0_2] : memref<80x32xf32, #tpu.memory_space<vmem>>, vector<80x32xf32>
    %2 = arith.addf %0, %1 : vector<80x32xf32>
    %c0_3 = arith.constant 0 : index
    %c0_4 = arith.constant 0 : index
    %3 = vector.load %arg3[%c0_3, %c0_4] : memref<32x32xf32, #tpu.memory_space<vmem>>, vector<32x32xf32>
    %cst = arith.constant dense<0.000000e+00> : vector<80x32xf32>
    %4 = tpu.matmul %0, %3, %cst {dimension_numbers = #tpu.dot_dimension_numbers<[1], [0], [0], [1], [0, 0, 1, 1], [], []>} : vector<80x32xf32>, vector<32x32xf32>, vector<80x32xf32> -> vector<80x32xf32>
    %c0_5 = arith.constant 0 : index
    %c0_6 = arith.constant 0 : index
    %5 = vector.load %arg4[%c0_5, %c0_6] : memref<1x32xf32, #tpu.memory_space<vmem>>, vector<1x32xf32>
    %6 = vector.broadcast %5 : vector<1x32xf32> to vector<80x32xf32>
    %7 = arith.addf %4, %6 : vector<80x32xf32>
    %c0_7 = arith.constant 0 : index
    %c0_8 = arith.constant 0 : index
    %8 = vector.load %arg7[%c0_7, %c0_8] : memref<80x32xf32, #tpu.memory_space<vmem>>, vector<80x32xf32>
    tpu.vector_store %arg7[%c0_7, %c0_8], %7 {strides = array<i32>} : memref<80x32xf32, #tpu.memory_space<vmem>>, vector<80x32xf32>,
    %c0_9 = arith.constant 0 : index
    %c0_10 = arith.constant 0 : index
    %9 = vector.load %arg5[%c0_9, %c0_10] : memref<32x96xf32, #tpu.memory_space<vmem>>, vector<32x96xf32>
    %cst_11 = arith.constant dense<0.000000e+00> : vector<80x96xf32>
    %10 = tpu.matmul %2, %9, %cst_11 {dimension_numbers = #tpu.dot_dimension_numbers<[1], [0], [0], [1], [0, 0, 1, 1], [], []>} : vector<80x32xf32>, vector<32x96xf32>, vector<80x96xf32> -> vector<80x96xf32>
    %c0_12 = arith.constant 0 : index
    %c0_13 = arith.constant 0 : index
    %11 = vector.load %arg6[%c0_12, %c0_13] : memref<1x96xf32, #tpu.memory_space<vmem>>, vector<1x96xf32>
    %12 = vector.broadcast %11 : vector<1x96xf32> to vector<80x96xf32>
    %13 = arith.addf %10, %12 : vector<80x96xf32>
    %14 = vector.extract_strided_slice %13 {offsets = [0, 0], sizes = [80, 64], strides = [1, 1]} : vector<80x96xf32> to vector<80x64xf32>
    %c0_14 = arith.constant 0 : index
    %c0_15 = arith.constant 0 : index
    %15 = vector.load %arg8[%c0_14, %c0_15] : memref<80x64xf32, #tpu.memory_space<vmem>>, vector<80x64xf32>
    tpu.vector_store %arg8[%c0_14, %c0_15], %14 {strides = array<i32>} : memref<80x64xf32, #tpu.memory_space<vmem>>, vector<80x64xf32>,
    %16 = vector.extract_strided_slice %13 {offsets = [0, 64], sizes = [80, 32], strides = [1, 1]} : vector<80x96xf32> to vector<80x32xf32>
    %17 = vector.extract_strided_slice %16 {offsets = [0, 0], sizes = [80, 8], strides = [1, 1]} : vector<80x32xf32> to vector<80x8xf32>
    %cst_16 = arith.constant dense<0xFF800000> : vector<80xf32>
    %18 = vector.multi_reduction <maximumf>, %17, %cst_16 [1] : vector<80x8xf32> to vector<80xf32>
    %19 = vector.shape_cast %18 : vector<80xf32> to vector<80x1xf32>
    %20 = vector.broadcast %19 : vector<80x1xf32> to vector<80x8xf32>
    %21 = arith.subf %17, %20 : vector<80x8xf32>
    %22 = math.exp %21 : vector<80x8xf32>
    %cst_17 = arith.constant dense<0.000000e+00> : vector<80xf32>
    %23 = vector.multi_reduction <add>, %22, %cst_17 [1] : vector<80x8xf32> to vector<80xf32>
    %24 = vector.shape_cast %23 : vector<80xf32> to vector<80x1xf32>
    %25 = vector.broadcast %24 : vector<80x1xf32> to vector<80x8xf32>
    %26 = arith.divf %22, %25 : vector<80x8xf32>
    %27 = vector.extract_strided_slice %16 {offsets = [0, 8], sizes = [80, 8], strides = [1, 1]} : vector<80x32xf32> to vector<80x8xf32>
    %cst_18 = arith.constant dense<0xFF800000> : vector<80xf32>
    %28 = vector.multi_reduction <maximumf>, %27, %cst_18 [1] : vector<80x8xf32> to vector<80xf32>
    %29 = vector.shape_cast %28 : vector<80xf32> to vector<80x1xf32>
    %30 = vector.broadcast %29 : vector<80x1xf32> to vector<80x8xf32>
    %31 = arith.subf %27, %30 : vector<80x8xf32>
    %32 = math.exp %31 : vector<80x8xf32>
    %cst_19 = arith.constant dense<0.000000e+00> : vector<80xf32>
    %33 = vector.multi_reduction <add>, %32, %cst_19 [1] : vector<80x8xf32> to vector<80xf32>
    %34 = vector.shape_cast %33 : vector<80xf32> to vector<80x1xf32>
    %35 = vector.broadcast %34 : vector<80x1xf32> to vector<80x8xf32>
    %36 = arith.divf %32, %35 : vector<80x8xf32>
    %37 = vector.extract_strided_slice %16 {offsets = [0, 16], sizes = [80, 8], strides = [1, 1]} : vector<80x32xf32> to vector<80x8xf32>
    %cst_20 = arith.constant dense<0xFF800000> : vector<80xf32>
    %38 = vector.multi_reduction <maximumf>, %37, %cst_20 [1] : vector<80x8xf32> to vector<80xf32>
    %39 = vector.shape_cast %38 : vector<80xf32> to vector<80x1xf32>
    %40 = vector.broadcast %39 : vector<80x1xf32> to vector<80x8xf32>
    %41 = arith.subf %37, %40 : vector<80x8xf32>
    %42 = math.exp %41 : vector<80x8xf32>
    %cst_21 = arith.constant dense<0.000000e+00> : vector<80xf32>
    %43 = vector.multi_reduction <add>, %42, %cst_21 [1] : vector<80x8xf32> to vector<80xf32>
    %44 = vector.shape_cast %43 : vector<80xf32> to vector<80x1xf32>
    %45 = vector.broadcast %44 : vector<80x1xf32> to vector<80x8xf32>
    %46 = arith.divf %42, %45 : vector<80x8xf32>
    %47 = vector.extract_strided_slice %16 {offsets = [0, 24], sizes = [80, 8], strides = [1, 1]} : vector<80x32xf32> to vector<80x8xf32>
    %cst_22 = arith.constant dense<0xFF800000> : vector<80xf32>
    %48 = vector.multi_reduction <maximumf>, %47, %cst_22 [1] : vector<80x8xf32> to vector<80xf32>
    %49 = vector.shape_cast %48 : vector<80xf32> to vector<80x1xf32>
    %50 = vector.broadcast %49 : vector<80x1xf32> to vector<80x8xf32>
    %51 = arith.subf %47, %50 : vector<80x8xf32>
    %52 = math.exp %51 : vector<80x8xf32>
    %cst_23 = arith.constant dense<0.000000e+00> : vector<80xf32>
    %53 = vector.multi_reduction <add>, %52, %cst_23 [1] : vector<80x8xf32> to vector<80xf32>
    %54 = vector.shape_cast %53 : vector<80xf32> to vector<80x1xf32>
    %55 = vector.broadcast %54 : vector<80x1xf32> to vector<80x8xf32>
    %56 = arith.divf %52, %55 : vector<80x8xf32>
    %57 = tpu.concatenate %26, %36, %46, %56 in 1 : vector<80x8xf32>, vector<80x8xf32>, vector<80x8xf32>, vector<80x8xf32> -> vector<80x32xf32>
    %c0_24 = arith.constant 0 : index
    %c0_25 = arith.constant 0 : index
    %58 = vector.load %arg9[%c0_24, %c0_25] : memref<80x32xf32, #tpu.memory_space<vmem>>, vector<80x32xf32>
    tpu.vector_store %arg9[%c0_24, %c0_25], %57 {strides = array<i32>} : memref<80x32xf32, #tpu.memory_space<vmem>>, vector<80x32xf32>,
    return
  }
  func.func @transform_0(%arg0: i32) -> (i32, i32) {
    %c0_i32 = arith.constant 0 : i32
    %c0_i32_0 = arith.constant 0 : i32
    return %arg0, %c0_i32 : i32, i32
  }
  func.func @transform_1(%arg0: i32) -> (i32, i32) {
    %c0_i32 = arith.constant 0 : i32
    %c0_i32_0 = arith.constant 0 : i32
    return %arg0, %c0_i32 : i32, i32
  }
  func.func @transform_2(%arg0: i32) -> (i32, i32) {
    %c0_i32 = arith.constant 0 : i32
    %c0_i32_0 = arith.constant 0 : i32
    %c0_i32_1 = arith.constant 0 : i32
    return %c0_i32, %c0_i32_0 : i32, i32
  }
  func.func @transform_3(%arg0: i32) -> (i32, i32) {
    %c0_i32 = arith.constant 0 : i32
    %c0_i32_0 = arith.constant 0 : i32
    %c0_i32_1 = arith.constant 0 : i32
    return %c0_i32, %c0_i32_0 : i32, i32
  }
  func.func @transform_4(%arg0: i32) -> (i32, i32) {
    %c0_i32 = arith.constant 0 : i32
    %c0_i32_0 = arith.constant 0 : i32
    %c0_i32_1 = arith.constant 0 : i32
    return %c0_i32, %c0_i32_0 : i32, i32
  }
  func.func @transform_5(%arg0: i32) -> (i32, i32) {
    %c0_i32 = arith.constant 0 : i32
    %c0_i32_0 = arith.constant 0 : i32
    %c0_i32_1 = arith.constant 0 : i32
    return %c0_i32, %c0_i32_0 : i32, i32
  }
  func.func @transform_6(%arg0: i32) -> (i32, i32) {
    %c0_i32 = arith.constant 0 : i32
    %c0_i32_0 = arith.constant 0 : i32
    return %arg0, %c0_i32 : i32, i32
  }
  func.func @transform_7(%arg0: i32) -> (i32, i32) {
    %c0_i32 = arith.constant 0 : i32
    %c0_i32_0 = arith.constant 0 : i32
    return %arg0, %c0_i32 : i32, i32
  }
  func.func @transform_8(%arg0: i32) -> (i32, i32) {
    %c0_i32 = arith.constant 0 : i32
    %c0_i32_0 = arith.constant 0 : i32
    return %arg0, %c0_i32 : i32, i32
  }
}

</mosaic_0001>

<llo_original>
// kernel: tpu_custom_call.1
$region0: #{tpu_custom_call.1}
  #allocation0 [shape = 'u32[]', space=smem, size = 0x4, offset = 0x4, fixed_abs, tag = 'smem constant byte address 0x4 - core index']
  #allocation1 [shape = 'u32[72,128]{1,0:T(1,128)}', space=vmem, size = 0x9000, scoped, tag = 'internal scratch']
  %s0 = inlined_call_operand.vmem [shape: f32[160,32], index: 0, kind: input, shape index: {}]
  %s1 = inlined_call_operand.vmem [shape: f32[160,32], index: 1, kind: input, shape index: {}]
  %s2 = inlined_call_operand.vmem [shape: f32[32,32], index: 2, kind: input, shape index: {}]
  %s3 = inlined_call_operand.vmem [shape: f32[1,32], index: 3, kind: input, shape index: {}]
  %s4 = inlined_call_operand.vmem [shape: f32[32,96], index: 4, kind: input, shape index: {}]
  %s5 = inlined_call_operand.vmem [shape: f32[1,96], index: 5, kind: input, shape index: {}]
  %s6 = inlined_call_operand.vmem [shape: f32[160,32], index: 6, kind: output, shape index: {0}]
  %s7 = inlined_call_operand.vmem [shape: f32[160,64], index: 7, kind: output, shape index: {1}]
  %s8 = inlined_call_operand.vmem [shape: f32[160,32], index: 8, kind: output, shape index: {2}]
  %9 = xla_tuple %s6, %s7, %s8
  %s10 = sld [smem:[#allocation0]]
  $region73: #{tpu_custom_call.1} parent=0
    _
  %s12 = ssub.s32 1, %s10
  %s13 = scalar_select 0, %s12, %s10
  loop: start=0, step=1, limit=4
  $region2: #{tpu_custom_call.1} parent=0 // loop_pre_header
    _
  $region3: #{tpu_custom_call.1} parent=0 // loop_header
    %s15 = sphi 0, %s19
    %p16 = scmp.ge.s32.totalorder %s15, 4
    %s25 = sphi 0, %s27
    %s28 = sphi 0, %s25
    %s29 = sphi 0, %s28
    %s45 = sphi 0, %s29
    %s51 = sphi 0, %s53
    %s54 = sphi 0, %s51
    %s55 = sphi 0, %s54
    %s71 = sphi 0, %s55
    %s75 = sphi 0, %s75
    %s77 = sphi 0, %s75
    %s78 = sphi 0, %s77
    %s92 = sphi 0, %s78
    %s96 = sphi 0, %s96
    %s98 = sphi 0, %s96
    %s99 = sphi 0, %s98
    %s113 = sphi 0, %s99
    %s117 = sphi 0, %s117
    %s119 = sphi 0, %s117
    %s120 = sphi 0, %s119
    %s134 = sphi 0, %s120
    %s138 = sphi 0, %s138
    %s140 = sphi 0, %s138
    %s141 = sphi 0, %s140
    %s155 = sphi 0, %s141
    %s161 = sphi 0, %s163
    %s164 = sphi 0, %s161
    %s165 = sphi 0, %s164
    %s181 = sphi 0, %s165
    %s187 = sphi 0, %s189
    %s190 = sphi 0, %s187
    %s191 = sphi 0, %s190
    %s207 = sphi 0, %s191
    %s213 = sphi 0, %s215
    %s216 = sphi 0, %s213
    %s217 = sphi 0, %s216
    %s233 = sphi 0, %s217
  $region4: #{tpu_custom_call.1} parent=0 // loop_header_branch
    %18 = sbr.rel (%p16) target = $region8
  $region5: #{tpu_custom_call.1} parent=0 // loop_body
    %s20 = ssub.s32 %s15, 1
    %s21 = ssub.s32 %s15, 2
    %s22 = sadd.s32 %s15, 1
    %s23 = ssub.s32 %s15, %s22
    %p24 = scmp.eq.s32.totalorder %s23, 0
    %s26 = sadd.s32 %s25, 1
    %s27 = scalar_select %p24, %s25, %s26
    %p30 = pneg %p24
    %p31 = scmp.eq.s32.totalorder %s15, 1
    %p32 = por %p30, %p31
    %p33 = scmp.ne.s32.totalorder %s25, %s28
    %p34 = scmp.eq.s32.totalorder %s15, 0
    %p35 = por %p33, %p34
    %p36 = scmp.ne.s32.totalorder %s25, %s28
    %p37 = scmp.eq.s32.totalorder %s20, 1
    %p38 = por %p36, %p37
    %p39 = scmp.ne.s32.totalorder %s28, %s29
    %p40 = scmp.eq.s32.totalorder %s20, 0
    %p41 = por %p39, %p40
    %p42 = scmp.ne.s32.totalorder %s28, %s29
    %p43 = scmp.eq.s32.totalorder %s21, 1
    %p44 = por %p42, %p43
    %p46 = scmp.ne.s32.totalorder %s29, %s45
    %p47 = scmp.eq.s32.totalorder %s21, 0
    %p48 = por %p46, %p47
    %s49 = ssub.s32 %s15, %s22
    %p50 = scmp.eq.s32.totalorder %s49, 0
    %s52 = sadd.s32 %s51, 1
    %s53 = scalar_select %p50, %s51, %s52
    %p56 = pneg %p50
    %p57 = scmp.eq.s32.totalorder %s15, 1
    %p58 = por %p56, %p57
    %p59 = scmp.ne.s32.totalorder %s51, %s54
    %p60 = scmp.eq.s32.totalorder %s15, 0
    %p61 = por %p59, %p60
    %p62 = scmp.ne.s32.totalorder %s51, %s54
    %p63 = scmp.eq.s32.totalorder %s20, 1
    %p64 = por %p62, %p63
    %p65 = scmp.ne.s32.totalorder %s54, %s55
    %p66 = scmp.eq.s32.totalorder %s20, 0
    %p67 = por %p65, %p66
    %p68 = scmp.ne.s32.totalorder %s54, %s55
    %p69 = scmp.eq.s32.totalorder %s21, 1
    %p70 = por %p68, %p69
    %p72 = scmp.ne.s32.totalorder %s55, %s71
    %p73 = scmp.eq.s32.totalorder %s21, 0
    %p74 = por %p72, %p73
    %s76 = sadd.s32 %s75, 1
    %p79 = scmp.eq.s32.totalorder %s15, 1
    %p80 = scmp.ne.s32.totalorder %s75, %s77
    %p81 = scmp.eq.s32.totalorder %s15, 0
    %p82 = por %p80, %p81
    %p83 = scmp.ne.s32.totalorder %s75, %s77
    %p84 = scmp.eq.s32.totalorder %s20, 1
    %p85 = por %p83, %p84
    %p86 = scmp.ne.s32.totalorder %s77, %s78
    %p87 = scmp.eq.s32.totalorder %s20, 0
    %p88 = por %p86, %p87
    %p89 = scmp.ne.s32.totalorder %s77, %s78
    %p90 = scmp.eq.s32.totalorder %s21, 1
    %p91 = por %p89, %p90
    %p93 = scmp.ne.s32.totalorder %s78, %s92
    %p94 = scmp.eq.s32.totalorder %s21, 0
    %p95 = por %p93, %p94
    %s97 = sadd.s32 %s96, 1
    %p100 = scmp.eq.s32.totalorder %s15, 1
    %p101 = scmp.ne.s32.totalorder %s96, %s98
    %p102 = scmp.eq.s32.totalorder %s15, 0
    %p103 = por %p101, %p102
    %p104 = scmp.ne.s32.totalorder %s96, %s98
    %p105 = scmp.eq.s32.totalorder %s20, 1
    %p106 = por %p104, %p105
    %p107 = scmp.ne.s32.totalorder %s98, %s99
    %p108 = scmp.eq.s32.totalorder %s20, 0
    %p109 = por %p107, %p108
    %p110 = scmp.ne.s32.totalorder %s98, %s99
    %p111 = scmp.eq.s32.totalorder %s21, 1
    %p112 = por %p110, %p111
    %p114 = scmp.ne.s32.totalorder %s99, %s113
    %p115 = scmp.eq.s32.totalorder %s21, 0
    %p116 = por %p114, %p115
    %s118 = sadd.s32 %s117, 1
    %p121 = scmp.eq.s32.totalorder %s15, 1
    %p122 = scmp.ne.s32.totalorder %s117, %s119
    %p123 = scmp.eq.s32.totalorder %s15, 0
    %p124 = por %p122, %p123
    %p125 = scmp.ne.s32.totalorder %s117, %s119
    %p126 = scmp.eq.s32.totalorder %s20, 1
    %p127 = por %p125, %p126
    %p128 = scmp.ne.s32.totalorder %s119, %s120
    %p129 = scmp.eq.s32.totalorder %s20, 0
    %p130 = por %p128, %p129
    %p131 = scmp.ne.s32.totalorder %s119, %s120
    %p132 = scmp.eq.s32.totalorder %s21, 1
    %p133 = por %p131, %p132
    %p135 = scmp.ne.s32.totalorder %s120, %s134
    %p136 = scmp.eq.s32.totalorder %s21, 0
    %p137 = por %p135, %p136
    %s139 = sadd.s32 %s138, 1
    %p142 = scmp.eq.s32.totalorder %s15, 1
    %p143 = scmp.ne.s32.totalorder %s138, %s140
    %p144 = scmp.eq.s32.totalorder %s15, 0
    %p145 = por %p143, %p144
    %p146 = scmp.ne.s32.totalorder %s138, %s140
    %p147 = scmp.eq.s32.totalorder %s20, 1
    %p148 = por %p146, %p147
    %p149 = scmp.ne.s32.totalorder %s140, %s141
    %p150 = scmp.eq.s32.totalorder %s20, 0
    %p151 = por %p149, %p150
    %p152 = scmp.ne.s32.totalorder %s140, %s141
    %p153 = scmp.eq.s32.totalorder %s21, 1
    %p154 = por %p152, %p153
    %p156 = scmp.ne.s32.totalorder %s141, %s155
    %p157 = scmp.eq.s32.totalorder %s21, 0
    %p158 = por %p156, %p157
    %s159 = ssub.s32 %s15, %s22
    %p160 = scmp.eq.s32.totalorder %s159, 0
    %s162 = sadd.s32 %s161, 1
    %s163 = scalar_select %p160, %s161, %s162
    %p166 = pneg %p160
    %p167 = scmp.eq.s32.totalorder %s15, 1
    %p168 = por %p166, %p167
    %p169 = scmp.ne.s32.totalorder %s161, %s164
    %p170 = scmp.eq.s32.totalorder %s15, 0
    %p171 = por %p169, %p170
    %p172 = scmp.ne.s32.totalorder %s161, %s164
    %p173 = scmp.eq.s32.totalorder %s20, 1
    %p174 = por %p172, %p173
    %p175 = scmp.ne.s32.totalorder %s164, %s165
    %p176 = scmp.eq.s32.totalorder %s20, 0
    %p177 = por %p175, %p176
    %p178 = scmp.ne.s32.totalorder %s164, %s165
    %p179 = scmp.eq.s32.totalorder %s21, 1
    %p180 = por %p178, %p179
    %p182 = scmp.ne.s32.totalorder %s165, %s181
    %p183 = scmp.eq.s32.totalorder %s21, 0
    %p184 = por %p182, %p183
    %s185 = ssub.s32 %s15, %s22
    %p186 = scmp.eq.s32.totalorder %s185, 0
    %s188 = sadd.s32 %s187, 1
    %s189 = scalar_select %p186, %s187, %s188
    %p192 = pneg %p186
    %p193 = scmp.eq.s32.totalorder %s15, 1
    %p194 = por %p192, %p193
    %p195 = scmp.ne.s32.totalorder %s187, %s190
    %p196 = scmp.eq.s32.totalorder %s15, 0
    %p197 = por %p195, %p196
    %p198 = scmp.ne.s32.totalorder %s187, %s190
    %p199 = scmp.eq.s32.totalorder %s20, 1
    %p200 = por %p198, %p199
    %p201 = scmp.ne.s32.totalorder %s190, %s191
    %p202 = scmp.eq.s32.totalorder %s20, 0
    %p203 = por %p201, %p202
    %p204 = scmp.ne.s32.totalorder %s190, %s191
    %p205 = scmp.eq.s32.totalorder %s21, 1
    %p206 = por %p204, %p205
    %p208 = scmp.ne.s32.totalorder %s191, %s207
    %p209 = scmp.eq.s32.totalorder %s21, 0
    %p210 = por %p208, %p209
    %s211 = ssub.s32 %s15, %s22
    %p212 = scmp.eq.s32.totalorder %s211, 0
    %s214 = sadd.s32 %s213, 1
    %s215 = scalar_select %p212, %s213, %s214
    %p218 = pneg %p212
    %p219 = scmp.eq.s32.totalorder %s15, 1
    %p220 = por %p218, %p219
    %p221 = scmp.ne.s32.totalorder %s213, %s216
    %p222 = scmp.eq.s32.totalorder %s15, 0
    %p223 = por %p221, %p222
    %p224 = scmp.ne.s32.totalorder %s213, %s216
    %p225 = scmp.eq.s32.totalorder %s20, 1
    %p226 = por %p224, %p225
    %p227 = scmp.ne.s32.totalorder %s216, %s217
    %p228 = scmp.eq.s32.totalorder %s20, 0
    %p229 = por %p227, %p228
    %p230 = scmp.ne.s32.totalorder %s216, %s217
    %p231 = scmp.eq.s32.totalorder %s21, 1
    %p232 = por %p230, %p231
    %p234 = scmp.ne.s32.totalorder %s217, %s233
    %p235 = scmp.eq.s32.totalorder %s21, 0
    %p236 = por %p234, %p235
    %p237 = scmp.le.s32.totalorder 1, %s15
    %p238 = scmp.lt.s32.totalorder %s15, 3
    %p239 = pnand %p237, %p238
    %p240 = pneg %p239
    // Predicated region
    $region9: #{tpu_custom_call.1} parent=5 // pred_check
      _
    $region10: #{tpu_custom_call.1} parent=5 // pred_check_branch
      %242 = sbr.rel (%p239) target = $region12
    $region11: #{tpu_custom_call.1} parent=5 // pred_region
      %s243 = ssub.s32 %s15, 1
      // Predicated region
      $region13: #{tpu_custom_call.1} parent=11 // pred_check
        %p244 = pneg %p88
      $region14: #{tpu_custom_call.1} parent=11 // pred_check_branch
        %246 = sbr.rel (%p244) target = $region16
      $region15: #{tpu_custom_call.1} parent=11 // pred_region
        _
      $region16: #{tpu_custom_call.1} parent=11 // pred_fallthru
        _
      // Predicated region
      $region17: #{tpu_custom_call.1} parent=11 // pred_check
        %p247 = pneg %p109
      $region18: #{tpu_custom_call.1} parent=11 // pred_check_branch
        %249 = sbr.rel (%p247) target = $region20
      $region19: #{tpu_custom_call.1} parent=11 // pred_region
        _
      $region20: #{tpu_custom_call.1} parent=11 // pred_fallthru
        _
      // Predicated region
      $region21: #{tpu_custom_call.1} parent=11 // pred_check
        %p250 = pneg %p130
      $region22: #{tpu_custom_call.1} parent=11 // pred_check_branch
        %252 = sbr.rel (%p250) target = $region24
      $region23: #{tpu_custom_call.1} parent=11 // pred_region
        _
      $region24: #{tpu_custom_call.1} parent=11 // pred_fallthru
        _
      // Predicated region
      $region25: #{tpu_custom_call.1} parent=11 // pred_check
        %p253 = pneg %p151
      $region26: #{tpu_custom_call.1} parent=11 // pred_check_branch
        %255 = sbr.rel (%p253) target = $region28
      $region27: #{tpu_custom_call.1} parent=11 // pred_region
        _
      $region28: #{tpu_custom_call.1} parent=11 // pred_fallthru
        _
    $region12: #{tpu_custom_call.1} parent=5 // pred_fallthru
      _
    %p256 = scmp.lt.s32.totalorder %s15, 2
    // Predicated region
    $region29: #{tpu_custom_call.1} parent=5 // pred_check
      %p257 = pneg %p256
    $region30: #{tpu_custom_call.1} parent=5 // pred_check_branch
      %259 = sbr.rel (%p257) target = $region32
    $region31: #{tpu_custom_call.1} parent=5 // pred_region
      // Predicated region
      $region33: #{tpu_custom_call.1} parent=31 // pred_check
        %p260 = pneg %p35
      $region34: #{tpu_custom_call.1} parent=31 // pred_check_branch
        %262 = sbr.rel (%p260) target = $region36
      $region35: #{tpu_custom_call.1} parent=31 // pred_region
        %s263 = smul.u32 10, %s15
        %p264 = scmp.lt.s32.totalorder %s263, 19
        %s265 = scalar_select %p264, %s263, 19
        %s266 = smul.addr %s265, 8
        %s267 = scalar_lea.vmem %s0, %s266
        %s268 = smul.u32 10, %s15
      $region36: #{tpu_custom_call.1} parent=31 // pred_fallthru
        _
      // Predicated region
      $region37: #{tpu_custom_call.1} parent=31 // pred_check
        %p269 = pneg %p61
      $region38: #{tpu_custom_call.1} parent=31 // pred_check_branch
        %271 = sbr.rel (%p269) target = $region40
      $region39: #{tpu_custom_call.1} parent=31 // pred_region
        %s272 = smul.u32 10, %s15
        %p273 = scmp.lt.s32.totalorder %s272, 19
        %s274 = scalar_select %p273, %s272, 19
        %s275 = smul.addr %s274, 8
        %s276 = scalar_lea.vmem %s1, %s275
        %s277 = smul.u32 10, %s15
      $region40: #{tpu_custom_call.1} parent=31 // pred_fallthru
        _
    $region32: #{tpu_custom_call.1} parent=5 // pred_fallthru
      _
    %p278 = scmp.le.s32.totalorder 1, %s15
    %p279 = scmp.lt.s32.totalorder %s15, 3
    %p280 = pnand %p278, %p279
    %p281 = pneg %p280
    // Predicated region
    $region41: #{tpu_custom_call.1} parent=5 // pred_check
      _
    $region42: #{tpu_custom_call.1} parent=5 // pred_check_branch
      %283 = sbr.rel (%p280) target = $region44
    $region43: #{tpu_custom_call.1} parent=5 // pred_region
      %s284 = ssub.s32 %s15, 1
      %s285 = smul.u32 10, %s20
      %p286 = scmp.lt.s32.totalorder %s285, 19
      %s287 = scalar_select %p286, %s285, 19
      %s288 = smul.addr %s287, 8
      %s289 = scalar_lea.vmem %s0, %s288
      %p290 = pneg %p41
      %p291 = pneg %p38
      %s292 = smul.u32 10, %s20
      %p293 = scmp.lt.s32.totalorder %s292, 19
      %s294 = scalar_select %p293, %s292, 19
      %s295 = smul.addr %s294, 8
      %s296 = scalar_lea.vmem %s1, %s295
      %p297 = pneg %p67
      %p298 = pneg %p64
      %p299 = pneg %p88
      %p300 = pneg %p85
      %p301 = pneg %p109
      %p302 = pneg %p106
      %p303 = pneg %p130
      %p304 = pneg %p127
      %p305 = pneg %p151
      %p306 = pneg %p148
      %p307 = pneg %p177
      %p308 = pneg %p174
      %s309 = smul.u32 10, %s20
      %p310 = scmp.lt.s32.totalorder %s309, 19
      %s311 = scalar_select %p310, %s309, 19
      %s312 = smul.addr %s311, 8
      %s313 = scalar_lea.vmem %s6, %s312
      %p314 = pneg %p203
      %p315 = pneg %p200
      %s316 = smul.u32 10, %s20
      %p317 = scmp.lt.s32.totalorder %s316, 19
      %s318 = scalar_select %p317, %s316, 19
      %s319 = smul.addr %s318, 8
      %s320 = scalar_lea.vmem %s7, %s319
      %p321 = pneg %p229
      %p322 = pneg %p226
      %s323 = smul.u32 10, %s20
      %p324 = scmp.lt.s32.totalorder %s323, 19
      %s325 = scalar_select %p324, %s323, 19
      %s326 = smul.addr %s325, 8
      %s327 = scalar_lea.vmem %s8, %s326
      %s328 = smul.u32 10, %s20
      %p329 = scmp.lt.s32.totalorder %s328, 19
      %s330 = scalar_select %p329, %s328, 19
      %s331 = smul.addr %s330, 8
      %s332 = scalar_lea.vmem %s0, %s331
      %s333 = smul.u32 10, %s20
      %s334 = smul.u32 10, %s20
      %p335 = scmp.lt.s32.totalorder %s334, 19
      %s336 = scalar_select %p335, %s334, 19
      %s337 = smul.addr %s336, 8
      %s338 = scalar_lea.vmem %s1, %s337
      %s339 = smul.u32 10, %s20
      %s340 = smul.u32 10, %s20
      %p341 = scmp.lt.s32.totalorder %s340, 19
      %s342 = scalar_select %p341, %s340, 19
      %s343 = smul.addr %s342, 8
      %s344 = scalar_lea.vmem %s6, %s343
      %s345 = smul.u32 10, %s20
      %s346 = smul.u32 10, %s20
      %p347 = scmp.lt.s32.totalorder %s346, 19
      %s348 = scalar_select %p347, %s346, 19
      %s349 = smul.addr %s348, 8
      %s350 = scalar_lea.vmem %s7, %s349
      %s351 = smul.u32 10, %s20
      %s352 = smul.u32 10, %s20
      %p353 = scmp.lt.s32.totalorder %s352, 19
      %s354 = scalar_select %p353, %s352, 19
      %s355 = smul.addr %s354, 8
      %s356 = scalar_lea.vmem %s8, %s355
      %s357 = smul.u32 10, %s20
      %v358 = vld [vmem:[%s332] sm:$0xff]
      %v359 = vld [vmem:[%s332 + $0x8] sm:$0xff]
      %v360 = vld [vmem:[%s332 + $0x10] sm:$0xff]
      %v361 = vld [vmem:[%s332 + $0x18] sm:$0xff]
      %v362 = vld [vmem:[%s332 + $0x20] sm:$0xff]
      %v363 = vld [vmem:[%s332 + $0x28] sm:$0xff]
      %v364 = vld [vmem:[%s332 + $0x30] sm:$0xff]
      %v365 = vld [vmem:[%s332 + $0x38] sm:$0xff]
      %v366 = vld [vmem:[%s332 + $0x40] sm:$0xff]
      %v367 = vld [vmem:[%s332 + $0x48] sm:$0xff]
      %v368 = vld [vmem:[%s338] sm:$0xff]
      %v369 = vld [vmem:[%s338 + $0x8] sm:$0xff]
      %v370 = vld [vmem:[%s338 + $0x10] sm:$0xff]
      %v371 = vld [vmem:[%s338 + $0x18] sm:$0xff]
      %v372 = vld [vmem:[%s338 + $0x20] sm:$0xff]
      %v373 = vld [vmem:[%s338 + $0x28] sm:$0xff]
      %v374 = vld [vmem:[%s338 + $0x30] sm:$0xff]
      %v375 = vld [vmem:[%s338 + $0x38] sm:$0xff]
      %v376 = vld [vmem:[%s338 + $0x40] sm:$0xff]
      %v377 = vld [vmem:[%s338 + $0x48] sm:$0xff]
      %v378 = vadd.f32 %v358, %v368
      %v379 = vadd.f32 %v359, %v369
      %v380 = vadd.f32 %v360, %v370
      %v381 = vadd.f32 %v361, %v371
      %v382 = vadd.f32 %v362, %v372
      %v383 = vadd.f32 %v363, %v373
      %v384 = vadd.f32 %v364, %v374
      %v385 = vadd.f32 %v365, %v375
      %v386 = vadd.f32 %v366, %v376
      %v387 = vadd.f32 %v367, %v377
      %v388 = vld [vmem:[%s2] sm:$0xff]
      %v389 = vld [vmem:[%s2 + $0x8] sm:$0xff]
      %v390 = vld [vmem:[%s2 + $0x10] sm:$0xff]
      %v391 = vld [vmem:[%s2 + $0x18] sm:$0xff]
      %v392 = vld [vmem:[%s3] sm:$0x1]
      %v394 = vperm.slane %v392, 0
      %vm396 = vcmask 261120
      %v398 = vsel %vm396, %v358, 0
      %v401 = vsel %vm396, %v359, 0
      %v404 = vsel %vm396, %v360, 0
      %v407 = vsel %vm396, %v361, 0
      %v410 = vsel %vm396, %v362, 0
      %v413 = vsel %vm396, %v363, 0
      %v416 = vsel %vm396, %v364, 0
      %v419 = vsel %vm396, %v365, 0
      %v422 = vsel %vm396, %v366, 0
      %v425 = vsel %vm396, %v367, 0
      %427 = vmatpush.msra.mxu0 0.0
      %428 = vmatpush.msra.mxu0 0.0
      %429 = vmatpush.msra.mxu0 0.0
      %430 = vmatpush.msra.mxu0 0.0
      %431 = vmatpush.msra.mxu0 0.0
      %432 = vmatpush.msra.mxu0 0.0
      %433 = vmatpush.msra.mxu0 0.0
      %434 = vmatpush.msra.mxu0 0.0
      %435 = vmatpush.msra.mxu0 0.0
      %436 = vmatpush.msra.mxu0 0.0
      %437 = vmatpush.msra.mxu0 0.0
      %438 = vmatpush.msra.mxu0 0.0
      %439 = vmatpush.msra.mxu0 %v391
      %440 = vmatpush.msra.mxu0 %v390
      %441 = vmatpush.msra.mxu0 %v389
      %442 = vmatpush.msra.mxu0 %v388
      %443 = vmatmul.f32.gmra.mxu0 %v398
      %v444 = vpop.f32.mrf.mxu0
      %v445 = vadd.f32 %v394, %v444
      %446 = vmatmul.f32.gmra.mxu0 %v401
      %v447 = vpop.f32.mrf.mxu0
      %v448 = vadd.f32 %v394, %v447
      %449 = vmatmul.f32.gmra.mxu0 %v404
      %v450 = vpop.f32.mrf.mxu0
      %v451 = vadd.f32 %v394, %v450
      %452 = vmatmul.f32.gmra.mxu0 %v407
      %v453 = vpop.f32.mrf.mxu0
      %v454 = vadd.f32 %v394, %v453
      %455 = vmatmul.f32.gmra.mxu0 %v410
      %v456 = vpop.f32.mrf.mxu0
      %v457 = vadd.f32 %v394, %v456
      %458 = vmatmul.f32.gmra.mxu0 %v413
      %v459 = vpop.f32.mrf.mxu0
      %v460 = vadd.f32 %v394, %v459
      %461 = vmatmul.f32.gmra.mxu0 %v416
      %v462 = vpop.f32.mrf.mxu0
      %v463 = vadd.f32 %v394, %v462
      %464 = vmatmul.f32.gmra.mxu0 %v419
      %v465 = vpop.f32.mrf.mxu0
      %v466 = vadd.f32 %v394, %v465
      %467 = vmatmul.f32.gmra.mxu0 %v422
      %v468 = vpop.f32.mrf.mxu0
      %v469 = vadd.f32 %v394, %v468
      %470 = vmatmul.f32.gmra.mxu0 %v425
      %v471 = vpop.f32.mrf.mxu0
      %v472 = vadd.f32 %v394, %v471
      %473 = vdwg.mxu0
      %474 = vst.msk [vmem:[%s344] sm:$0xff] %vm396, %v445
      %475 = vst.msk [vmem:[%s344 + $0x8] sm:$0xff] %vm396, %v448
      %476 = vst.msk [vmem:[%s344 + $0x10] sm:$0xff] %vm396, %v451
      %477 = vst.msk [vmem:[%s344 + $0x18] sm:$0xff] %vm396, %v454
      %478 = vst.msk [vmem:[%s344 + $0x20] sm:$0xff] %vm396, %v457
      %479 = vst.msk [vmem:[%s344 + $0x28] sm:$0xff] %vm396, %v460
      %480 = vst.msk [vmem:[%s344 + $0x30] sm:$0xff] %vm396, %v463
      %481 = vst.msk [vmem:[%s344 + $0x38] sm:$0xff] %vm396, %v466
      %482 = vst.msk [vmem:[%s344 + $0x40] sm:$0xff] %vm396, %v469
      %483 = vst.msk [vmem:[%s344 + $0x48] sm:$0xff] %vm396, %v472
      %v484 = vld [vmem:[%s4] sm:$0xff]
      %v485 = vld [vmem:[%s4 + $0x8] sm:$0xff]
      %v486 = vld [vmem:[%s4 + $0x10] sm:$0xff]
      %v487 = vld [vmem:[%s4 + $0x18] sm:$0xff]
      %v488 = vld [vmem:[%s5] sm:$0x1]
      %v490 = vperm.slane %v488, 0
      %v493 = vsel %vm396, %v378, 0
      %v496 = vsel %vm396, %v379, 0
      %v499 = vsel %vm396, %v380, 0
      %v502 = vsel %vm396, %v381, 0
      %v505 = vsel %vm396, %v382, 0
      %v508 = vsel %vm396, %v383, 0
      %v511 = vsel %vm396, %v384, 0
      %v514 = vsel %vm396, %v385, 0
      %v517 = vsel %vm396, %v386, 0
      %v520 = vsel %vm396, %v387, 0
      %522 = vmatpush.msra.mxu0 0.0
      %523 = vmatpush.msra.mxu0 0.0
      %524 = vmatpush.msra.mxu0 0.0
      %525 = vmatpush.msra.mxu0 0.0
      %526 = vmatpush.msra.mxu0 0.0
      %527 = vmatpush.msra.mxu0 0.0
      %528 = vmatpush.msra.mxu0 0.0
      %529 = vmatpush.msra.mxu0 0.0
      %530 = vmatpush.msra.mxu0 0.0
      %531 = vmatpush.msra.mxu0 0.0
      %532 = vmatpush.msra.mxu0 0.0
      %533 = vmatpush.msra.mxu0 0.0
      %534 = vmatpush.msra.mxu0 %v487
      %535 = vmatpush.msra.mxu0 %v486
      %536 = vmatpush.msra.mxu0 %v485
      %537 = vmatpush.msra.mxu0 %v484
      %538 = vmatmul.f32.gmra.mxu0 %v493
      %v539 = vpop.f32.mrf.mxu0
      %v540 = vadd.f32 %v490, %v539
      %541 = vmatmul.f32.gmra.mxu0 %v496
      %v542 = vpop.f32.mrf.mxu0
      %v543 = vadd.f32 %v490, %v542
      %544 = vmatmul.f32.gmra.mxu0 %v499
      %v545 = vpop.f32.mrf.mxu0
      %v546 = vadd.f32 %v490, %v545
      %547 = vmatmul.f32.gmra.mxu0 %v502
      %v548 = vpop.f32.mrf.mxu0
      %v549 = vadd.f32 %v490, %v548
      %550 = vmatmul.f32.gmra.mxu0 %v505
      %v551 = vpop.f32.mrf.mxu0
      %v552 = vadd.f32 %v490, %v551
      %553 = vmatmul.f32.gmra.mxu0 %v508
      %v554 = vpop.f32.mrf.mxu0
      %v555 = vadd.f32 %v490, %v554
      %556 = vmatmul.f32.gmra.mxu0 %v511
      %v557 = vpop.f32.mrf.mxu0
      %v558 = vadd.f32 %v490, %v557
      %559 = vmatmul.f32.gmra.mxu0 %v514
      %v560 = vpop.f32.mrf.mxu0
      %v561 = vadd.f32 %v490, %v560
      %562 = vmatmul.f32.gmra.mxu0 %v517
      %v563 = vpop.f32.mrf.mxu0
      %v564 = vadd.f32 %v490, %v563
      %565 = vmatmul.f32.gmra.mxu0 %v520
      %v566 = vpop.f32.mrf.mxu0
      %v567 = vadd.f32 %v490, %v566
      %568 = vdwg.mxu0
      %vm569 = vcmask 523264
      %570 = vst.msk [vmem:[%s350] sm:$0xff] %vm569, %v540
      %571 = vst.msk [vmem:[%s350 + $0x8] sm:$0xff] %vm569, %v543
      %572 = vst.msk [vmem:[%s350 + $0x10] sm:$0xff] %vm569, %v546
      %573 = vst.msk [vmem:[%s350 + $0x18] sm:$0xff] %vm569, %v549
      %574 = vst.msk [vmem:[%s350 + $0x20] sm:$0xff] %vm569, %v552
      %575 = vst.msk [vmem:[%s350 + $0x28] sm:$0xff] %vm569, %v555
      %576 = vst.msk [vmem:[%s350 + $0x30] sm:$0xff] %vm569, %v558
      %577 = vst.msk [vmem:[%s350 + $0x38] sm:$0xff] %vm569, %v561
      %578 = vst.msk [vmem:[%s350 + $0x40] sm:$0xff] %vm569, %v564
      %579 = vst.msk [vmem:[%s350 + $0x48] sm:$0xff] %vm569, %v567
      %vm580 = vcmask 589312
      %v581 = vsel %vm580, %v540, -inf
      %582 = vmax.xlane.f32.xlu0 %v581
      %v583 = vpop.xlane.xlu0 %582
      %v584 = vsel %vm580, %v543, -inf
      %585 = vmax.xlane.f32.xlu0 %v584
      %v586 = vpop.xlane.xlu0 %585
      %v587 = vsel %vm580, %v546, -inf
      %588 = vmax.xlane.f32.xlu0 %v587
      %v589 = vpop.xlane.xlu0 %588
      %v590 = vsel %vm580, %v549, -inf
      %591 = vmax.xlane.f32.xlu0 %v590
      %v592 = vpop.xlane.xlu0 %591
      %v593 = vsel %vm580, %v552, -inf
      %594 = vmax.xlane.f32.xlu0 %v593
      %v595 = vpop.xlane.xlu0 %594
      %v596 = vsel %vm580, %v555, -inf
      %597 = vmax.xlane.f32.xlu0 %v596
      %v598 = vpop.xlane.xlu0 %597
      %v599 = vsel %vm580, %v558, -inf
      %600 = vmax.xlane.f32.xlu0 %v599
      %v601 = vpop.xlane.xlu0 %600
      %v602 = vsel %vm580, %v561, -inf
      %603 = vmax.xlane.f32.xlu0 %v602
      %v604 = vpop.xlane.xlu0 %603
      %v605 = vsel %vm580, %v564, -inf
      %606 = vmax.xlane.f32.xlu0 %v605
      %v607 = vpop.xlane.xlu0 %606
      %v608 = vsel %vm580, %v567, -inf
      %609 = vmax.xlane.f32.xlu0 %v608
      %v610 = vpop.xlane.xlu0 %609
      %v611 = vsub.f32 %v540, %v583
      %v612 = vsub.f32 %v543, %v586
      %v613 = vsub.f32 %v546, %v589
      %v614 = vsub.f32 %v549, %v592
      %v615 = vsub.f32 %v552, %v595
      %v616 = vsub.f32 %v555, %v598
      %v617 = vsub.f32 %v558, %v601
      %v618 = vsub.f32 %v561, %v604
      %v619 = vsub.f32 %v564, %v607
      %v620 = vsub.f32 %v567, %v610
      %v621 = vmul.f32 %v611, 1.442695
      %v622 = vpow.pop %v621
      %v623 = vmul.f32 %v612, 1.442695
      %v624 = vpow.pop %v623
      %v625 = vmul.f32 %v613, 1.442695
      %v626 = vpow.pop %v625
      %v627 = vmul.f32 %v614, 1.442695
      %v628 = vpow.pop %v627
      %v629 = vmul.f32 %v615, 1.442695
      %v630 = vpow.pop %v629
      %v631 = vmul.f32 %v616, 1.442695
      %v632 = vpow.pop %v631
      %v633 = vmul.f32 %v617, 1.442695
      %v634 = vpow.pop %v633
      %v635 = vmul.f32 %v618, 1.442695
      %v636 = vpow.pop %v635
      %v637 = vmul.f32 %v619, 1.442695
      %v638 = vpow.pop %v637
      %v639 = vmul.f32 %v620, 1.442695
      %v640 = vpow.pop %v639
      %651 = vrot.lane.b32.xlu0 %v622, 64
      %v652 = vpop.permute.xlu0 %651
      %653 = vrot.lane.b32.xlu0 %v624, 64
      %v654 = vpop.permute.xlu0 %653
      %655 = vrot.lane.b32.xlu0 %v626, 64
      %v656 = vpop.permute.xlu0 %655
      %657 = vrot.lane.b32.xlu0 %v628, 64
      %v658 = vpop.permute.xlu0 %657
      %659 = vrot.lane.b32.xlu0 %v630, 64
      %v660 = vpop.permute.xlu0 %659
      %661 = vrot.lane.b32.xlu0 %v632, 64
      %v662 = vpop.permute.xlu0 %661
      %663 = vrot.lane.b32.xlu0 %v634, 64
      %v664 = vpop.permute.xlu0 %663
      %665 = vrot.lane.b32.xlu0 %v636, 64
      %v666 = vpop.permute.xlu0 %665
      %667 = vrot.lane.b32.xlu0 %v638, 64
      %v668 = vpop.permute.xlu0 %667
      %669 = vrot.lane.b32.xlu0 %v640, 64
      %v670 = vpop.permute.xlu0 %669
      %vm681 = vcmask 64512
      %v682 = vsel %vm681, %v652, 0.0
      %683 = vadd.xlane.f32.xlu0 %v682
      %v684 = vpop.xlane.xlu0 %683
      %v685 = vsel %vm681, %v654, 0.0
      %686 = vadd.xlane.f32.xlu0 %v685
      %v687 = vpop.xlane.xlu0 %686
      %v688 = vsel %vm681, %v656, 0.0
      %689 = vadd.xlane.f32.xlu0 %v688
      %v690 = vpop.xlane.xlu0 %689
      %v691 = vsel %vm681, %v658, 0.0
      %692 = vadd.xlane.f32.xlu0 %v691
      %v693 = vpop.xlane.xlu0 %692
      %v694 = vsel %vm681, %v660, 0.0
      %695 = vadd.xlane.f32.xlu0 %v694
      %v696 = vpop.xlane.xlu0 %695
      %v697 = vsel %vm681, %v662, 0.0
      %698 = vadd.xlane.f32.xlu0 %v697
      %v699 = vpop.xlane.xlu0 %698
      %v700 = vsel %vm681, %v664, 0.0
      %701 = vadd.xlane.f32.xlu0 %v700
      %v702 = vpop.xlane.xlu0 %701
      %v703 = vsel %vm681, %v666, 0.0
      %704 = vadd.xlane.f32.xlu0 %v703
      %v705 = vpop.xlane.xlu0 %704
      %v706 = vsel %vm681, %v668, 0.0
      %707 = vadd.xlane.f32.xlu0 %v706
      %v708 = vpop.xlane.xlu0 %707
      %v709 = vsel %vm681, %v670, 0.0
      %710 = vadd.xlane.f32.xlu0 %v709
      %v711 = vpop.xlane.xlu0 %710
      %v712 = vrcp.pop %v684
      %v713 = vmul.f32 %v684, %v712
      %v714 = vsub.f32 1.0, %v713
      %v715 = vmul.f32 %v712, %v714
      %v716 = vadd.f32 %v712, %v715
      %vm717 = vweird.f32 %v684
      %vm718 = vweird.f32 %v712
      %vm719 = vmor %vm717, %vm718
      %v720 = vsel %vm719, %v712, %v716
      %v721 = vand.u32 2147483647, %v684
      %vm722 = vcmp.eq.f32.partialorder %v721, 8.507059e+37
      %v723 = vand.u32 %v684, 2147483648
      %v724 = vor.u32 1.1754944e-38, %v723
      %v725 = vsel %vm722, %v724, %v720
      %v726 = vmul.f32 %v622, %v725
      %v727 = vrcp.pop %v687
      %v728 = vmul.f32 %v687, %v727
      %v729 = vsub.f32 1.0, %v728
      %v730 = vmul.f32 %v727, %v729
      %v731 = vadd.f32 %v727, %v730
      %vm732 = vweird.f32 %v687
      %vm733 = vweird.f32 %v727
      %vm734 = vmor %vm732, %vm733
      %v735 = vsel %vm734, %v727, %v731
      %v736 = vand.u32 2147483647, %v687
      %vm737 = vcmp.eq.f32.partialorder %v736, 8.507059e+37
      %v738 = vand.u32 %v687, 2147483648
      %v739 = vor.u32 1.1754944e-38, %v738
      %v740 = vsel %vm737, %v739, %v735
      %v741 = vmul.f32 %v624, %v740
      %v742 = vrcp.pop %v690
      %v743 = vmul.f32 %v690, %v742
      %v744 = vsub.f32 1.0, %v743
      %v745 = vmul.f32 %v742, %v744
      %v746 = vadd.f32 %v742, %v745
      %vm747 = vweird.f32 %v690
      %vm748 = vweird.f32 %v742
      %vm749 = vmor %vm747, %vm748
      %v750 = vsel %vm749, %v742, %v746
      %v751 = vand.u32 2147483647, %v690
      %vm752 = vcmp.eq.f32.partialorder %v751, 8.507059e+37
      %v753 = vand.u32 %v690, 2147483648
      %v754 = vor.u32 1.1754944e-38, %v753
      %v755 = vsel %vm752, %v754, %v750
      %v756 = vmul.f32 %v626, %v755
      %v757 = vrcp.pop %v693
      %v758 = vmul.f32 %v693, %v757
      %v759 = vsub.f32 1.0, %v758
      %v760 = vmul.f32 %v757, %v759
      %v761 = vadd.f32 %v757, %v760
      %vm762 = vweird.f32 %v693
      %vm763 = vweird.f32 %v757
      %vm764 = vmor %vm762, %vm763
      %v765 = vsel %vm764, %v757, %v761
      %v766 = vand.u32 2147483647, %v693
      %vm767 = vcmp.eq.f32.partialorder %v766, 8.507059e+37
      %v768 = vand.u32 %v693, 2147483648
      %v769 = vor.u32 1.1754944e-38, %v768
      %v770 = vsel %vm767, %v769, %v765
      %v771 = vmul.f32 %v628, %v770
      %v772 = vrcp.pop %v696
      %v773 = vmul.f32 %v696, %v772
      %v774 = vsub.f32 1.0, %v773
      %v775 = vmul.f32 %v772, %v774
      %v776 = vadd.f32 %v772, %v775
      %vm777 = vweird.f32 %v696
      %vm778 = vweird.f32 %v772
      %vm779 = vmor %vm777, %vm778
      %v780 = vsel %vm779, %v772, %v776
      %v781 = vand.u32 2147483647, %v696
      %vm782 = vcmp.eq.f32.partialorder %v781, 8.507059e+37
      %v783 = vand.u32 %v696, 2147483648
      %v784 = vor.u32 1.1754944e-38, %v783
      %v785 = vsel %vm782, %v784, %v780
      %v786 = vmul.f32 %v630, %v785
      %v787 = vrcp.pop %v699
      %v788 = vmul.f32 %v699, %v787
      %v789 = vsub.f32 1.0, %v788
      %v790 = vmul.f32 %v787, %v789
      %v791 = vadd.f32 %v787, %v790
      %vm792 = vweird.f32 %v699
      %vm793 = vweird.f32 %v787
      %vm794 = vmor %vm792, %vm793
      %v795 = vsel %vm794, %v787, %v791
      %v796 = vand.u32 2147483647, %v699
      %vm797 = vcmp.eq.f32.partialorder %v796, 8.507059e+37
      %v798 = vand.u32 %v699, 2147483648
      %v799 = vor.u32 1.1754944e-38, %v798
      %v800 = vsel %vm797, %v799, %v795
      %v801 = vmul.f32 %v632, %v800
      %v802 = vrcp.pop %v702
      %v803 = vmul.f32 %v702, %v802
      %v804 = vsub.f32 1.0, %v803
      %v805 = vmul.f32 %v802, %v804
      %v806 = vadd.f32 %v802, %v805
      %vm807 = vweird.f32 %v702
      %vm808 = vweird.f32 %v802
      %vm809 = vmor %vm807, %vm808
      %v810 = vsel %vm809, %v802, %v806
      %v811 = vand.u32 2147483647, %v702
      %vm812 = vcmp.eq.f32.partialorder %v811, 8.507059e+37
      %v813 = vand.u32 %v702, 2147483648
      %v814 = vor.u32 1.1754944e-38, %v813
      %v815 = vsel %vm812, %v814, %v810
      %v816 = vmul.f32 %v634, %v815
      %v817 = vrcp.pop %v705
      %v818 = vmul.f32 %v705, %v817
      %v819 = vsub.f32 1.0, %v818
      %v820 = vmul.f32 %v817, %v819
      %v821 = vadd.f32 %v817, %v820
      %vm822 = vweird.f32 %v705
      %vm823 = vweird.f32 %v817
      %vm824 = vmor %vm822, %vm823
      %v825 = vsel %vm824, %v817, %v821
      %v826 = vand.u32 2147483647, %v705
      %vm827 = vcmp.eq.f32.partialorder %v826, 8.507059e+37
      %v828 = vand.u32 %v705, 2147483648
      %v829 = vor.u32 1.1754944e-38, %v828
      %v830 = vsel %vm827, %v829, %v825
      %v831 = vmul.f32 %v636, %v830
      %v832 = vrcp.pop %v708
      %v833 = vmul.f32 %v708, %v832
      %v834 = vsub.f32 1.0, %v833
      %v835 = vmul.f32 %v832, %v834
      %v836 = vadd.f32 %v832, %v835
      %vm837 = vweird.f32 %v708
      %vm838 = vweird.f32 %v832
      %vm839 = vmor %vm837, %vm838
      %v840 = vsel %vm839, %v832, %v836
      %v841 = vand.u32 2147483647, %v708
      %vm842 = vcmp.eq.f32.partialorder %v841, 8.507059e+37
      %v843 = vand.u32 %v708, 2147483648
      %v844 = vor.u32 1.1754944e-38, %v843
      %v845 = vsel %vm842, %v844, %v840
      %v846 = vmul.f32 %v638, %v845
      %v847 = vrcp.pop %v711
      %v848 = vmul.f32 %v711, %v847
      %v849 = vsub.f32 1.0, %v848
      %v850 = vmul.f32 %v847, %v849
      %v851 = vadd.f32 %v847, %v850
      %vm852 = vweird.f32 %v711
      %vm853 = vweird.f32 %v847
      %vm854 = vmor %vm852, %vm853
      %v855 = vsel %vm854, %v847, %v851
      %v856 = vand.u32 2147483647, %v711
      %vm857 = vcmp.eq.f32.partialorder %v856, 8.507059e+37
      %v858 = vand.u32 %v711, 2147483648
      %v859 = vor.u32 1.1754944e-38, %v858
      %v860 = vsel %vm857, %v859, %v855
      %v861 = vmul.f32 %v640, %v860
      %vm862 = vcmask 654912
      %v863 = vsel %vm862, %v540, -inf
      %864 = vmax.xlane.f32.xlu0 %v863
      %v865 = vpop.xlane.xlu0 %864
      %v866 = vsel %vm862, %v543, -inf
      %867 = vmax.xlane.f32.xlu0 %v866
      %v868 = vpop.xlane.xlu0 %867
      %v869 = vsel %vm862, %v546, -inf
      %870 = vmax.xlane.f32.xlu0 %v869
      %v871 = vpop.xlane.xlu0 %870
      %v872 = vsel %vm862, %v549, -inf
      %873 = vmax.xlane.f32.xlu0 %v872
      %v874 = vpop.xlane.xlu0 %873
      %v875 = vsel %vm862, %v552, -inf
      %876 = vmax.xlane.f32.xlu0 %v875
      %v877 = vpop.xlane.xlu0 %876
      %v878 = vsel %vm862, %v555, -inf
      %879 = vmax.xlane.f32.xlu0 %v878
      %v880 = vpop.xlane.xlu0 %879
      %v881 = vsel %vm862, %v558, -inf
      %882 = vmax.xlane.f32.xlu0 %v881
      %v883 = vpop.xlane.xlu0 %882
      %v884 = vsel %vm862, %v561, -inf
      %885 = vmax.xlane.f32.xlu0 %v884
      %v886 = vpop.xlane.xlu0 %885
      %v887 = vsel %vm862, %v564, -inf
      %888 = vmax.xlane.f32.xlu0 %v887
      %v889 = vpop.xlane.xlu0 %888
      %v890 = vsel %vm862, %v567, -inf
      %891 = vmax.xlane.f32.xlu0 %v890
      %v892 = vpop.xlane.xlu0 %891
      %v893 = vsub.f32 %v540, %v865
      %v894 = vsub.f32 %v543, %v868
      %v895 = vsub.f32 %v546, %v871
      %v896 = vsub.f32 %v549, %v874
      %v897 = vsub.f32 %v552, %v877
      %v898 = vsub.f32 %v555, %v880
      %v899 = vsub.f32 %v558, %v883
      %v900 = vsub.f32 %v561, %v886
      %v901 = vsub.f32 %v564, %v889
      %v902 = vsub.f32 %v567, %v892
      %v903 = vmul.f32 %v893, 1.442695
      %v904 = vpow.pop %v903
      %v905 = vmul.f32 %v894, 1.442695
      %v906 = vpow.pop %v905
      %v907 = vmul.f32 %v895, 1.442695
      %v908 = vpow.pop %v907
      %v909 = vmul.f32 %v896, 1.442695
      %v910 = vpow.pop %v909
      %v911 = vmul.f32 %v897, 1.442695
      %v912 = vpow.pop %v911
      %v913 = vmul.f32 %v898, 1.442695
      %v914 = vpow.pop %v913
      %v915 = vmul.f32 %v899, 1.442695
      %v916 = vpow.pop %v915
      %v917 = vmul.f32 %v900, 1.442695
      %v918 = vpow.pop %v917
      %v919 = vmul.f32 %v901, 1.442695
      %v920 = vpow.pop %v919
      %v921 = vmul.f32 %v902, 1.442695
      %v922 = vpow.pop %v921
      %933 = vrot.lane.b32.xlu0 %v904, 56
      %v934 = vpop.permute.xlu0 %933
      %935 = vrot.lane.b32.xlu0 %v906, 56
      %v936 = vpop.permute.xlu0 %935
      %937 = vrot.lane.b32.xlu0 %v908, 56
      %v938 = vpop.permute.xlu0 %937
      %939 = vrot.lane.b32.xlu0 %v910, 56
      %v940 = vpop.permute.xlu0 %939
      %941 = vrot.lane.b32.xlu0 %v912, 56
      %v942 = vpop.permute.xlu0 %941
      %943 = vrot.lane.b32.xlu0 %v914, 56
      %v944 = vpop.permute.xlu0 %943
      %945 = vrot.lane.b32.xlu0 %v916, 56
      %v946 = vpop.permute.xlu0 %945
      %947 = vrot.lane.b32.xlu0 %v918, 56
      %v948 = vpop.permute.xlu0 %947
      %949 = vrot.lane.b32.xlu0 %v920, 56
      %v950 = vpop.permute.xlu0 %949
      %951 = vrot.lane.b32.xlu0 %v922, 56
      %v952 = vpop.permute.xlu0 %951
      %v963 = vsel %vm681, %v934, 0.0
      %964 = vadd.xlane.f32.xlu0 %v963
      %v965 = vpop.xlane.xlu0 %964
      %v966 = vsel %vm681, %v936, 0.0
      %967 = vadd.xlane.f32.xlu0 %v966
      %v968 = vpop.xlane.xlu0 %967
      %v969 = vsel %vm681, %v938, 0.0
      %970 = vadd.xlane.f32.xlu0 %v969
      %v971 = vpop.xlane.xlu0 %970
      %v972 = vsel %vm681, %v940, 0.0
      %973 = vadd.xlane.f32.xlu0 %v972
      %v974 = vpop.xlane.xlu0 %973
      %v975 = vsel %vm681, %v942, 0.0
      %976 = vadd.xlane.f32.xlu0 %v975
      %v977 = vpop.xlane.xlu0 %976
      %v978 = vsel %vm681, %v944, 0.0
      %979 = vadd.xlane.f32.xlu0 %v978
      %v980 = vpop.xlane.xlu0 %979
      %v981 = vsel %vm681, %v946, 0.0
      %982 = vadd.xlane.f32.xlu0 %v981
      %v983 = vpop.xlane.xlu0 %982
      %v984 = vsel %vm681, %v948, 0.0
      %985 = vadd.xlane.f32.xlu0 %v984
      %v986 = vpop.xlane.xlu0 %985
      %v987 = vsel %vm681, %v950, 0.0
      %988 = vadd.xlane.f32.xlu0 %v987
      %v989 = vpop.xlane.xlu0 %988
      %v990 = vsel %vm681, %v952, 0.0
      %991 = vadd.xlane.f32.xlu0 %v990
      %v992 = vpop.xlane.xlu0 %991
      %v993 = vrcp.pop %v965
      %v994 = vmul.f32 %v965, %v993
      %v995 = vsub.f32 1.0, %v994
      %v996 = vmul.f32 %v993, %v995
      %v997 = vadd.f32 %v993, %v996
      %vm998 = vweird.f32 %v965
      %vm999 = vweird.f32 %v993
      %vm1000 = vmor %vm998, %vm999
      %v1001 = vsel %vm1000, %v993, %v997
      %v1002 = vand.u32 2147483647, %v965
      %vm1003 = vcmp.eq.f32.partialorder %v1002, 8.507059e+37
      %v1004 = vand.u32 %v965, 2147483648
      %v1005 = vor.u32 1.1754944e-38, %v1004
      %v1006 = vsel %vm1003, %v1005, %v1001
      %v1007 = vmul.f32 %v904, %v1006
      %v1008 = vrcp.pop %v968
      %v1009 = vmul.f32 %v968, %v1008
      %v1010 = vsub.f32 1.0, %v1009
      %v1011 = vmul.f32 %v1008, %v1010
      %v1012 = vadd.f32 %v1008, %v1011
      %vm1013 = vweird.f32 %v968
      %vm1014 = vweird.f32 %v1008
      %vm1015 = vmor %vm1013, %vm1014
      %v1016 = vsel %vm1015, %v1008, %v1012
      %v1017 = vand.u32 2147483647, %v968
      %vm1018 = vcmp.eq.f32.partialorder %v1017, 8.507059e+37
      %v1019 = vand.u32 %v968, 2147483648
      %v1020 = vor.u32 1.1754944e-38, %v1019
      %v1021 = vsel %vm1018, %v1020, %v1016
      %v1022 = vmul.f32 %v906, %v1021
      %v1023 = vrcp.pop %v971
      %v1024 = vmul.f32 %v971, %v1023
      %v1025 = vsub.f32 1.0, %v1024
      %v1026 = vmul.f32 %v1023, %v1025
      %v1027 = vadd.f32 %v1023, %v1026
      %vm1028 = vweird.f32 %v971
      %vm1029 = vweird.f32 %v1023
      %vm1030 = vmor %vm1028, %vm1029
      %v1031 = vsel %vm1030, %v1023, %v1027
      %v1032 = vand.u32 2147483647, %v971
      %vm1033 = vcmp.eq.f32.partialorder %v1032, 8.507059e+37
      %v1034 = vand.u32 %v971, 2147483648
      %v1035 = vor.u32 1.1754944e-38, %v1034
      %v1036 = vsel %vm1033, %v1035, %v1031
      %v1037 = vmul.f32 %v908, %v1036
      %v1038 = vrcp.pop %v974
      %v1039 = vmul.f32 %v974, %v1038
      %v1040 = vsub.f32 1.0, %v1039
      %v1041 = vmul.f32 %v1038, %v1040
      %v1042 = vadd.f32 %v1038, %v1041
      %vm1043 = vweird.f32 %v974
      %vm1044 = vweird.f32 %v1038
      %vm1045 = vmor %vm1043, %vm1044
      %v1046 = vsel %vm1045, %v1038, %v1042
      %v1047 = vand.u32 2147483647, %v974
      %vm1048 = vcmp.eq.f32.partialorder %v1047, 8.507059e+37
      %v1049 = vand.u32 %v974, 2147483648
      %v1050 = vor.u32 1.1754944e-38, %v1049
      %v1051 = vsel %vm1048, %v1050, %v1046
      %v1052 = vmul.f32 %v910, %v1051
      %v1053 = vrcp.pop %v977
      %v1054 = vmul.f32 %v977, %v1053
      %v1055 = vsub.f32 1.0, %v1054
      %v1056 = vmul.f32 %v1053, %v1055
      %v1057 = vadd.f32 %v1053, %v1056
      %vm1058 = vweird.f32 %v977
      %vm1059 = vweird.f32 %v1053
      %vm1060 = vmor %vm1058, %vm1059
      %v1061 = vsel %vm1060, %v1053, %v1057
      %v1062 = vand.u32 2147483647, %v977
      %vm1063 = vcmp.eq.f32.partialorder %v1062, 8.507059e+37
      %v1064 = vand.u32 %v977, 2147483648
      %v1065 = vor.u32 1.1754944e-38, %v1064
      %v1066 = vsel %vm1063, %v1065, %v1061
      %v1067 = vmul.f32 %v912, %v1066
      %v1068 = vrcp.pop %v980
      %v1069 = vmul.f32 %v980, %v1068
      %v1070 = vsub.f32 1.0, %v1069
      %v1071 = vmul.f32 %v1068, %v1070
      %v1072 = vadd.f32 %v1068, %v1071
      %vm1073 = vweird.f32 %v980
      %vm1074 = vweird.f32 %v1068
      %vm1075 = vmor %vm1073, %vm1074
      %v1076 = vsel %vm1075, %v1068, %v1072
      %v1077 = vand.u32 2147483647, %v980
      %vm1078 = vcmp.eq.f32.partialorder %v1077, 8.507059e+37
      %v1079 = vand.u32 %v980, 2147483648
      %v1080 = vor.u32 1.1754944e-38, %v1079
      %v1081 = vsel %vm1078, %v1080, %v1076
      %v1082 = vmul.f32 %v914, %v1081
      %v1083 = vrcp.pop %v983
      %v1084 = vmul.f32 %v983, %v1083
      %v1085 = vsub.f32 1.0, %v1084
      %v1086 = vmul.f32 %v1083, %v1085
      %v1087 = vadd.f32 %v1083, %v1086
      %vm1088 = vweird.f32 %v983
      %vm1089 = vweird.f32 %v1083
      %vm1090 = vmor %vm1088, %vm1089
      %v1091 = vsel %vm1090, %v1083, %v1087
      %v1092 = vand.u32 2147483647, %v983
      %vm1093 = vcmp.eq.f32.partialorder %v1092, 8.507059e+37
      %v1094 = vand.u32 %v983, 2147483648
      %v1095 = vor.u32 1.1754944e-38, %v1094
      %v1096 = vsel %vm1093, %v1095, %v1091
      %v1097 = vmul.f32 %v916, %v1096
      %v1098 = vrcp.pop %v986
      %v1099 = vmul.f32 %v986, %v1098
      %v1100 = vsub.f32 1.0, %v1099
      %v1101 = vmul.f32 %v1098, %v1100
      %v1102 = vadd.f32 %v1098, %v1101
      %vm1103 = vweird.f32 %v986
      %vm1104 = vweird.f32 %v1098
      %vm1105 = vmor %vm1103, %vm1104
      %v1106 = vsel %vm1105, %v1098, %v1102
      %v1107 = vand.u32 2147483647, %v986
      %vm1108 = vcmp.eq.f32.partialorder %v1107, 8.507059e+37
      %v1109 = vand.u32 %v986, 2147483648
      %v1110 = vor.u32 1.1754944e-38, %v1109
      %v1111 = vsel %vm1108, %v1110, %v1106
      %v1112 = vmul.f32 %v918, %v1111
      %v1113 = vrcp.pop %v989
      %v1114 = vmul.f32 %v989, %v1113
      %v1115 = vsub.f32 1.0, %v1114
      %v1116 = vmul.f32 %v1113, %v1115
      %v1117 = vadd.f32 %v1113, %v1116
      %vm1118 = vweird.f32 %v989
      %vm1119 = vweird.f32 %v1113
      %vm1120 = vmor %vm1118, %vm1119
      %v1121 = vsel %vm1120, %v1113, %v1117
      %v1122 = vand.u32 2147483647, %v989
      %vm1123 = vcmp.eq.f32.partialorder %v1122, 8.507059e+37
      %v1124 = vand.u32 %v989, 2147483648
      %v1125 = vor.u32 1.1754944e-38, %v1124
      %v1126 = vsel %vm1123, %v1125, %v1121
      %v1127 = vmul.f32 %v920, %v1126
      %v1128 = vrcp.pop %v992
      %v1129 = vmul.f32 %v992, %v1128
      %v1130 = vsub.f32 1.0, %v1129
      %v1131 = vmul.f32 %v1128, %v1130
      %v1132 = vadd.f32 %v1128, %v1131
      %vm1133 = vweird.f32 %v992
      %vm1134 = vweird.f32 %v1128
      %vm1135 = vmor %vm1133, %vm1134
      %v1136 = vsel %vm1135, %v1128, %v1132
      %v1137 = vand.u32 2147483647, %v992
      %vm1138 = vcmp.eq.f32.partialorder %v1137, 8.507059e+37
      %v1139 = vand.u32 %v992, 2147483648
      %v1140 = vor.u32 1.1754944e-38, %v1139
      %v1141 = vsel %vm1138, %v1140, %v1136
      %v1142 = vmul.f32 %v922, %v1141
      %vm1143 = vcmask 720512
      %v1144 = vsel %vm1143, %v540, -inf
      %1145 = vmax.xlane.f32.xlu0 %v1144
      %v1146 = vpop.xlane.xlu0 %1145
      %v1147 = vsel %vm1143, %v543, -inf
      %1148 = vmax.xlane.f32.xlu0 %v1147
      %v1149 = vpop.xlane.xlu0 %1148
      %v1150 = vsel %vm1143, %v546, -inf
      %1151 = vmax.xlane.f32.xlu0 %v1150
      %v1152 = vpop.xlane.xlu0 %1151
      %v1153 = vsel %vm1143, %v549, -inf
      %1154 = vmax.xlane.f32.xlu0 %v1153
      %v1155 = vpop.xlane.xlu0 %1154
      %v1156 = vsel %vm1143, %v552, -inf
      %1157 = vmax.xlane.f32.xlu0 %v1156
      %v1158 = vpop.xlane.xlu0 %1157
      %v1159 = vsel %vm1143, %v555, -inf
      %1160 = vmax.xlane.f32.xlu0 %v1159
      %v1161 = vpop.xlane.xlu0 %1160
      %v1162 = vsel %vm1143, %v558, -inf
      %1163 = vmax.xlane.f32.xlu0 %v1162
      %v1164 = vpop.xlane.xlu0 %1163
      %v1165 = vsel %vm1143, %v561, -inf
      %1166 = vmax.xlane.f32.xlu0 %v1165
      %v1167 = vpop.xlane.xlu0 %1166
      %v1168 = vsel %vm1143, %v564, -inf
      %1169 = vmax.xlane.f32.xlu0 %v1168
      %v1170 = vpop.xlane.xlu0 %1169
      %v1171 = vsel %vm1143, %v567, -inf
      %1172 = vmax.xlane.f32.xlu0 %v1171
      %v1173 = vpop.xlane.xlu0 %1172
      %v1174 = vsub.f32 %v540, %v1146
      %v1175 = vsub.f32 %v543, %v1149
      %v1176 = vsub.f32 %v546, %v1152
      %v1177 = vsub.f32 %v549, %v1155
      %v1178 = vsub.f32 %v552, %v1158
      %v1179 = vsub.f32 %v555, %v1161
      %v1180 = vsub.f32 %v558, %v1164
      %v1181 = vsub.f32 %v561, %v1167
      %v1182 = vsub.f32 %v564, %v1170
      %v1183 = vsub.f32 %v567, %v1173
      %v1184 = vmul.f32 %v1174, 1.442695
      %v1185 = vpow.pop %v1184
      %v1186 = vmul.f32 %v1175, 1.442695
      %v1187 = vpow.pop %v1186
      %v1188 = vmul.f32 %v1176, 1.442695
      %v1189 = vpow.pop %v1188
      %v1190 = vmul.f32 %v1177, 1.442695
      %v1191 = vpow.pop %v1190
      %v1192 = vmul.f32 %v1178, 1.442695
      %v1193 = vpow.pop %v1192
      %v1194 = vmul.f32 %v1179, 1.442695
      %v1195 = vpow.pop %v1194
      %v1196 = vmul.f32 %v1180, 1.442695
      %v1197 = vpow.pop %v1196
      %v1198 = vmul.f32 %v1181, 1.442695
      %v1199 = vpow.pop %v1198
      %v1200 = vmul.f32 %v1182, 1.442695
      %v1201 = vpow.pop %v1200
      %v1202 = vmul.f32 %v1183, 1.442695
      %v1203 = vpow.pop %v1202
      %1214 = vrot.lane.b32.xlu0 %v1185, 48
      %v1215 = vpop.permute.xlu0 %1214
      %1216 = vrot.lane.b32.xlu0 %v1187, 48
      %v1217 = vpop.permute.xlu0 %1216
      %1218 = vrot.lane.b32.xlu0 %v1189, 48
      %v1219 = vpop.permute.xlu0 %1218
      %1220 = vrot.lane.b32.xlu0 %v1191, 48
      %v1221 = vpop.permute.xlu0 %1220
      %1222 = vrot.lane.b32.xlu0 %v1193, 48
      %v1223 = vpop.permute.xlu0 %1222
      %1224 = vrot.lane.b32.xlu0 %v1195, 48
      %v1225 = vpop.permute.xlu0 %1224
      %1226 = vrot.lane.b32.xlu0 %v1197, 48
      %v1227 = vpop.permute.xlu0 %1226
      %1228 = vrot.lane.b32.xlu0 %v1199, 48
      %v1229 = vpop.permute.xlu0 %1228
      %1230 = vrot.lane.b32.xlu0 %v1201, 48
      %v1231 = vpop.permute.xlu0 %1230
      %1232 = vrot.lane.b32.xlu0 %v1203, 48
      %v1233 = vpop.permute.xlu0 %1232
      %v1244 = vsel %vm681, %v1215, 0.0
      %1245 = vadd.xlane.f32.xlu0 %v1244
      %v1246 = vpop.xlane.xlu0 %1245
      %v1247 = vsel %vm681, %v1217, 0.0
      %1248 = vadd.xlane.f32.xlu0 %v1247
      %v1249 = vpop.xlane.xlu0 %1248
      %v1250 = vsel %vm681, %v1219, 0.0
      %1251 = vadd.xlane.f32.xlu0 %v1250
      %v1252 = vpop.xlane.xlu0 %1251
      %v1253 = vsel %vm681, %v1221, 0.0
      %1254 = vadd.xlane.f32.xlu0 %v1253
      %v1255 = vpop.xlane.xlu0 %1254
      %v1256 = vsel %vm681, %v1223, 0.0
      %1257 = vadd.xlane.f32.xlu0 %v1256
      %v1258 = vpop.xlane.xlu0 %1257
      %v1259 = vsel %vm681, %v1225, 0.0
      %1260 = vadd.xlane.f32.xlu0 %v1259
      %v1261 = vpop.xlane.xlu0 %1260
      %v1262 = vsel %vm681, %v1227, 0.0
      %1263 = vadd.xlane.f32.xlu0 %v1262
      %v1264 = vpop.xlane.xlu0 %1263
      %v1265 = vsel %vm681, %v1229, 0.0
      %1266 = vadd.xlane.f32.xlu0 %v1265
      %v1267 = vpop.xlane.xlu0 %1266
      %v1268 = vsel %vm681, %v1231, 0.0
      %1269 = vadd.xlane.f32.xlu0 %v1268
      %v1270 = vpop.xlane.xlu0 %1269
      %v1271 = vsel %vm681, %v1233, 0.0
      %1272 = vadd.xlane.f32.xlu0 %v1271
      %v1273 = vpop.xlane.xlu0 %1272
      %v1274 = vrcp.pop %v1246
      %v1275 = vmul.f32 %v1246, %v1274
      %v1276 = vsub.f32 1.0, %v1275
      %v1277 = vmul.f32 %v1274, %v1276
      %v1278 = vadd.f32 %v1274, %v1277
      %vm1279 = vweird.f32 %v1246
      %vm1280 = vweird.f32 %v1274
      %vm1281 = vmor %vm1279, %vm1280
      %v1282 = vsel %vm1281, %v1274, %v1278
      %v1283 = vand.u32 2147483647, %v1246
      %vm1284 = vcmp.eq.f32.partialorder %v1283, 8.507059e+37
      %v1285 = vand.u32 %v1246, 2147483648
      %v1286 = vor.u32 1.1754944e-38, %v1285
      %v1287 = vsel %vm1284, %v1286, %v1282
      %v1288 = vmul.f32 %v1185, %v1287
      %v1289 = vrcp.pop %v1249
      %v1290 = vmul.f32 %v1249, %v1289
      %v1291 = vsub.f32 1.0, %v1290
      %v1292 = vmul.f32 %v1289, %v1291
      %v1293 = vadd.f32 %v1289, %v1292
      %vm1294 = vweird.f32 %v1249
      %vm1295 = vweird.f32 %v1289
      %vm1296 = vmor %vm1294, %vm1295
      %v1297 = vsel %vm1296, %v1289, %v1293
      %v1298 = vand.u32 2147483647, %v1249
      %vm1299 = vcmp.eq.f32.partialorder %v1298, 8.507059e+37
      %v1300 = vand.u32 %v1249, 2147483648
      %v1301 = vor.u32 1.1754944e-38, %v1300
      %v1302 = vsel %vm1299, %v1301, %v1297
      %v1303 = vmul.f32 %v1187, %v1302
      %v1304 = vrcp.pop %v1252
      %v1305 = vmul.f32 %v1252, %v1304
      %v1306 = vsub.f32 1.0, %v1305
      %v1307 = vmul.f32 %v1304, %v1306
      %v1308 = vadd.f32 %v1304, %v1307
      %vm1309 = vweird.f32 %v1252
      %vm1310 = vweird.f32 %v1304
      %vm1311 = vmor %vm1309, %vm1310
      %v1312 = vsel %vm1311, %v1304, %v1308
      %v1313 = vand.u32 2147483647, %v1252
      %vm1314 = vcmp.eq.f32.partialorder %v1313, 8.507059e+37
      %v1315 = vand.u32 %v1252, 2147483648
      %v1316 = vor.u32 1.1754944e-38, %v1315
      %v1317 = vsel %vm1314, %v1316, %v1312
      %v1318 = vmul.f32 %v1189, %v1317
      %v1319 = vrcp.pop %v1255
      %v1320 = vmul.f32 %v1255, %v1319
      %v1321 = vsub.f32 1.0, %v1320
      %v1322 = vmul.f32 %v1319, %v1321
      %v1323 = vadd.f32 %v1319, %v1322
      %vm1324 = vweird.f32 %v1255
      %vm1325 = vweird.f32 %v1319
      %vm1326 = vmor %vm1324, %vm1325
      %v1327 = vsel %vm1326, %v1319, %v1323
      %v1328 = vand.u32 2147483647, %v1255
      %vm1329 = vcmp.eq.f32.partialorder %v1328, 8.507059e+37
      %v1330 = vand.u32 %v1255, 2147483648
      %v1331 = vor.u32 1.1754944e-38, %v1330
      %v1332 = vsel %vm1329, %v1331, %v1327
      %v1333 = vmul.f32 %v1191, %v1332
      %v1334 = vrcp.pop %v1258
      %v1335 = vmul.f32 %v1258, %v1334
      %v1336 = vsub.f32 1.0, %v1335
      %v1337 = vmul.f32 %v1334, %v1336
      %v1338 = vadd.f32 %v1334, %v1337
      %vm1339 = vweird.f32 %v1258
      %vm1340 = vweird.f32 %v1334
      %vm1341 = vmor %vm1339, %vm1340
      %v1342 = vsel %vm1341, %v1334, %v1338
      %v1343 = vand.u32 2147483647, %v1258
      %vm1344 = vcmp.eq.f32.partialorder %v1343, 8.507059e+37
      %v1345 = vand.u32 %v1258, 2147483648
      %v1346 = vor.u32 1.1754944e-38, %v1345
      %v1347 = vsel %vm1344, %v1346, %v1342
      %v1348 = vmul.f32 %v1193, %v1347
      %v1349 = vrcp.pop %v1261
      %v1350 = vmul.f32 %v1261, %v1349
      %v1351 = vsub.f32 1.0, %v1350
      %v1352 = vmul.f32 %v1349, %v1351
      %v1353 = vadd.f32 %v1349, %v1352
      %vm1354 = vweird.f32 %v1261
      %vm1355 = vweird.f32 %v1349
      %vm1356 = vmor %vm1354, %vm1355
      %v1357 = vsel %vm1356, %v1349, %v1353
      %v1358 = vand.u32 2147483647, %v1261
      %vm1359 = vcmp.eq.f32.partialorder %v1358, 8.507059e+37
      %v1360 = vand.u32 %v1261, 2147483648
      %v1361 = vor.u32 1.1754944e-38, %v1360
      %v1362 = vsel %vm1359, %v1361, %v1357
      %v1363 = vmul.f32 %v1195, %v1362
      %v1364 = vrcp.pop %v1264
      %v1365 = vmul.f32 %v1264, %v1364
      %v1366 = vsub.f32 1.0, %v1365
      %v1367 = vmul.f32 %v1364, %v1366
      %v1368 = vadd.f32 %v1364, %v1367
      %vm1369 = vweird.f32 %v1264
      %vm1370 = vweird.f32 %v1364
      %vm1371 = vmor %vm1369, %vm1370
      %v1372 = vsel %vm1371, %v1364, %v1368
      %v1373 = vand.u32 2147483647, %v1264
      %vm1374 = vcmp.eq.f32.partialorder %v1373, 8.507059e+37
      %v1375 = vand.u32 %v1264, 2147483648
      %v1376 = vor.u32 1.1754944e-38, %v1375
      %v1377 = vsel %vm1374, %v1376, %v1372
      %v1378 = vmul.f32 %v1197, %v1377
      %v1379 = vrcp.pop %v1267
      %v1380 = vmul.f32 %v1267, %v1379
      %v1381 = vsub.f32 1.0, %v1380
      %v1382 = vmul.f32 %v1379, %v1381
      %v1383 = vadd.f32 %v1379, %v1382
      %vm1384 = vweird.f32 %v1267
      %vm1385 = vweird.f32 %v1379
      %vm1386 = vmor %vm1384, %vm1385
      %v1387 = vsel %vm1386, %v1379, %v1383
      %v1388 = vand.u32 2147483647, %v1267
      %vm1389 = vcmp.eq.f32.partialorder %v1388, 8.507059e+37
      %v1390 = vand.u32 %v1267, 2147483648
      %v1391 = vor.u32 1.1754944e-38, %v1390
      %v1392 = vsel %vm1389, %v1391, %v1387
      %v1393 = vmul.f32 %v1199, %v1392
      %v1394 = vrcp.pop %v1270
      %v1395 = vmul.f32 %v1270, %v1394
      %v1396 = vsub.f32 1.0, %v1395
      %v1397 = vmul.f32 %v1394, %v1396
      %v1398 = vadd.f32 %v1394, %v1397
      %vm1399 = vweird.f32 %v1270
      %vm1400 = vweird.f32 %v1394
      %vm1401 = vmor %vm1399, %vm1400
      %v1402 = vsel %vm1401, %v1394, %v1398
      %v1403 = vand.u32 2147483647, %v1270
      %vm1404 = vcmp.eq.f32.partialorder %v1403, 8.507059e+37
      %v1405 = vand.u32 %v1270, 2147483648
      %v1406 = vor.u32 1.1754944e-38, %v1405
      %v1407 = vsel %vm1404, %v1406, %v1402
      %v1408 = vmul.f32 %v1201, %v1407
      %v1409 = vrcp.pop %v1273
      %v1410 = vmul.f32 %v1273, %v1409
      %v1411 = vsub.f32 1.0, %v1410
      %v1412 = vmul.f32 %v1409, %v1411
      %v1413 = vadd.f32 %v1409, %v1412
      %vm1414 = vweird.f32 %v1273
      %vm1415 = vweird.f32 %v1409
      %vm1416 = vmor %vm1414, %vm1415
      %v1417 = vsel %vm1416, %v1409, %v1413
      %v1418 = vand.u32 2147483647, %v1273
      %vm1419 = vcmp.eq.f32.partialorder %v1418, 8.507059e+37
      %v1420 = vand.u32 %v1273, 2147483648
      %v1421 = vor.u32 1.1754944e-38, %v1420
      %v1422 = vsel %vm1419, %v1421, %v1417
      %v1423 = vmul.f32 %v1203, %v1422
      %vm1424 = vcmask 786112
      %v1425 = vsel %vm1424, %v540, -inf
      %1426 = vmax.xlane.f32.xlu0 %v1425
      %v1427 = vpop.xlane.xlu0 %1426
      %v1428 = vsel %vm1424, %v543, -inf
      %1429 = vmax.xlane.f32.xlu0 %v1428
      %v1430 = vpop.xlane.xlu0 %1429
      %v1431 = vsel %vm1424, %v546, -inf
      %1432 = vmax.xlane.f32.xlu0 %v1431
      %v1433 = vpop.xlane.xlu0 %1432
      %v1434 = vsel %vm1424, %v549, -inf
      %1435 = vmax.xlane.f32.xlu0 %v1434
      %v1436 = vpop.xlane.xlu0 %1435
      %v1437 = vsel %vm1424, %v552, -inf
      %1438 = vmax.xlane.f32.xlu0 %v1437
      %v1439 = vpop.xlane.xlu0 %1438
      %v1440 = vsel %vm1424, %v555, -inf
      %1441 = vmax.xlane.f32.xlu0 %v1440
      %v1442 = vpop.xlane.xlu0 %1441
      %v1443 = vsel %vm1424, %v558, -inf
      %1444 = vmax.xlane.f32.xlu0 %v1443
      %v1445 = vpop.xlane.xlu0 %1444
      %v1446 = vsel %vm1424, %v561, -inf
      %1447 = vmax.xlane.f32.xlu0 %v1446
      %v1448 = vpop.xlane.xlu0 %1447
      %v1449 = vsel %vm1424, %v564, -inf
      %1450 = vmax.xlane.f32.xlu0 %v1449
      %v1451 = vpop.xlane.xlu0 %1450
      %v1452 = vsel %vm1424, %v567, -inf
      %1453 = vmax.xlane.f32.xlu0 %v1452
      %v1454 = vpop.xlane.xlu0 %1453
      %v1455 = vsub.f32 %v540, %v1427
      %v1456 = vsub.f32 %v543, %v1430
      %v1457 = vsub.f32 %v546, %v1433
      %v1458 = vsub.f32 %v549, %v1436
      %v1459 = vsub.f32 %v552, %v1439
      %v1460 = vsub.f32 %v555, %v1442
      %v1461 = vsub.f32 %v558, %v1445
      %v1462 = vsub.f32 %v561, %v1448
      %v1463 = vsub.f32 %v564, %v1451
      %v1464 = vsub.f32 %v567, %v1454
      %v1465 = vmul.f32 %v1455, 1.442695
      %v1466 = vpow.pop %v1465
      %v1467 = vmul.f32 %v1456, 1.442695
      %v1468 = vpow.pop %v1467
      %v1469 = vmul.f32 %v1457, 1.442695
      %v1470 = vpow.pop %v1469
      %v1471 = vmul.f32 %v1458, 1.442695
      %v1472 = vpow.pop %v1471
      %v1473 = vmul.f32 %v1459, 1.442695
      %v1474 = vpow.pop %v1473
      %v1475 = vmul.f32 %v1460, 1.442695
      %v1476 = vpow.pop %v1475
      %v1477 = vmul.f32 %v1461, 1.442695
      %v1478 = vpow.pop %v1477
      %v1479 = vmul.f32 %v1462, 1.442695
      %v1480 = vpow.pop %v1479
      %v1481 = vmul.f32 %v1463, 1.442695
      %v1482 = vpow.pop %v1481
      %v1483 = vmul.f32 %v1464, 1.442695
      %v1484 = vpow.pop %v1483
      %1495 = vrot.lane.b32.xlu0 %v1466, 40
      %v1496 = vpop.permute.xlu0 %1495
      %1497 = vrot.lane.b32.xlu0 %v1468, 40
      %v1498 = vpop.permute.xlu0 %1497
      %1499 = vrot.lane.b32.xlu0 %v1470, 40
      %v1500 = vpop.permute.xlu0 %1499
      %1501 = vrot.lane.b32.xlu0 %v1472, 40
      %v1502 = vpop.permute.xlu0 %1501
      %1503 = vrot.lane.b32.xlu0 %v1474, 40
      %v1504 = vpop.permute.xlu0 %1503
      %1505 = vrot.lane.b32.xlu0 %v1476, 40
      %v1506 = vpop.permute.xlu0 %1505
      %1507 = vrot.lane.b32.xlu0 %v1478, 40
      %v1508 = vpop.permute.xlu0 %1507
      %1509 = vrot.lane.b32.xlu0 %v1480, 40
      %v1510 = vpop.permute.xlu0 %1509
      %1511 = vrot.lane.b32.xlu0 %v1482, 40
      %v1512 = vpop.permute.xlu0 %1511
      %1513 = vrot.lane.b32.xlu0 %v1484, 40
      %v1514 = vpop.permute.xlu0 %1513
      %v1525 = vsel %vm681, %v1496, 0.0
      %1526 = vadd.xlane.f32.xlu0 %v1525
      %v1527 = vpop.xlane.xlu0 %1526
      %v1528 = vsel %vm681, %v1498, 0.0
      %1529 = vadd.xlane.f32.xlu0 %v1528
      %v1530 = vpop.xlane.xlu0 %1529
      %v1531 = vsel %vm681, %v1500, 0.0
      %1532 = vadd.xlane.f32.xlu0 %v1531
      %v1533 = vpop.xlane.xlu0 %1532
      %v1534 = vsel %vm681, %v1502, 0.0
      %1535 = vadd.xlane.f32.xlu0 %v1534
      %v1536 = vpop.xlane.xlu0 %1535
      %v1537 = vsel %vm681, %v1504, 0.0
      %1538 = vadd.xlane.f32.xlu0 %v1537
      %v1539 = vpop.xlane.xlu0 %1538
      %v1540 = vsel %vm681, %v1506, 0.0
      %1541 = vadd.xlane.f32.xlu0 %v1540
      %v1542 = vpop.xlane.xlu0 %1541
      %v1543 = vsel %vm681, %v1508, 0.0
      %1544 = vadd.xlane.f32.xlu0 %v1543
      %v1545 = vpop.xlane.xlu0 %1544
      %v1546 = vsel %vm681, %v1510, 0.0
      %1547 = vadd.xlane.f32.xlu0 %v1546
      %v1548 = vpop.xlane.xlu0 %1547
      %v1549 = vsel %vm681, %v1512, 0.0
      %1550 = vadd.xlane.f32.xlu0 %v1549
      %v1551 = vpop.xlane.xlu0 %1550
      %v1552 = vsel %vm681, %v1514, 0.0
      %1553 = vadd.xlane.f32.xlu0 %v1552
      %v1554 = vpop.xlane.xlu0 %1553
      %v1555 = vrcp.pop %v1527
      %v1556 = vmul.f32 %v1527, %v1555
      %v1557 = vsub.f32 1.0, %v1556
      %v1558 = vmul.f32 %v1555, %v1557
      %v1559 = vadd.f32 %v1555, %v1558
      %vm1560 = vweird.f32 %v1527
      %vm1561 = vweird.f32 %v1555
      %vm1562 = vmor %vm1560, %vm1561
      %v1563 = vsel %vm1562, %v1555, %v1559
      %v1564 = vand.u32 2147483647, %v1527
      %vm1565 = vcmp.eq.f32.partialorder %v1564, 8.507059e+37
      %v1566 = vand.u32 %v1527, 2147483648
      %v1567 = vor.u32 1.1754944e-38, %v1566
      %v1568 = vsel %vm1565, %v1567, %v1563
      %v1569 = vmul.f32 %v1466, %v1568
      %v1570 = vrcp.pop %v1530
      %v1571 = vmul.f32 %v1530, %v1570
      %v1572 = vsub.f32 1.0, %v1571
      %v1573 = vmul.f32 %v1570, %v1572
      %v1574 = vadd.f32 %v1570, %v1573
      %vm1575 = vweird.f32 %v1530
      %vm1576 = vweird.f32 %v1570
      %vm1577 = vmor %vm1575, %vm1576
      %v1578 = vsel %vm1577, %v1570, %v1574
      %v1579 = vand.u32 2147483647, %v1530
      %vm1580 = vcmp.eq.f32.partialorder %v1579, 8.507059e+37
      %v1581 = vand.u32 %v1530, 2147483648
      %v1582 = vor.u32 1.1754944e-38, %v1581
      %v1583 = vsel %vm1580, %v1582, %v1578
      %v1584 = vmul.f32 %v1468, %v1583
      %v1585 = vrcp.pop %v1533
      %v1586 = vmul.f32 %v1533, %v1585
      %v1587 = vsub.f32 1.0, %v1586
      %v1588 = vmul.f32 %v1585, %v1587
      %v1589 = vadd.f32 %v1585, %v1588
      %vm1590 = vweird.f32 %v1533
      %vm1591 = vweird.f32 %v1585
      %vm1592 = vmor %vm1590, %vm1591
      %v1593 = vsel %vm1592, %v1585, %v1589
      %v1594 = vand.u32 2147483647, %v1533
      %vm1595 = vcmp.eq.f32.partialorder %v1594, 8.507059e+37
      %v1596 = vand.u32 %v1533, 2147483648
      %v1597 = vor.u32 1.1754944e-38, %v1596
      %v1598 = vsel %vm1595, %v1597, %v1593
      %v1599 = vmul.f32 %v1470, %v1598
      %v1600 = vrcp.pop %v1536
      %v1601 = vmul.f32 %v1536, %v1600
      %v1602 = vsub.f32 1.0, %v1601
      %v1603 = vmul.f32 %v1600, %v1602
      %v1604 = vadd.f32 %v1600, %v1603
      %vm1605 = vweird.f32 %v1536
      %vm1606 = vweird.f32 %v1600
      %vm1607 = vmor %vm1605, %vm1606
      %v1608 = vsel %vm1607, %v1600, %v1604
      %v1609 = vand.u32 2147483647, %v1536
      %vm1610 = vcmp.eq.f32.partialorder %v1609, 8.507059e+37
      %v1611 = vand.u32 %v1536, 2147483648
      %v1612 = vor.u32 1.1754944e-38, %v1611
      %v1613 = vsel %vm1610, %v1612, %v1608
      %v1614 = vmul.f32 %v1472, %v1613
      %v1615 = vrcp.pop %v1539
      %v1616 = vmul.f32 %v1539, %v1615
      %v1617 = vsub.f32 1.0, %v1616
      %v1618 = vmul.f32 %v1615, %v1617
      %v1619 = vadd.f32 %v1615, %v1618
      %vm1620 = vweird.f32 %v1539
      %vm1621 = vweird.f32 %v1615
      %vm1622 = vmor %vm1620, %vm1621
      %v1623 = vsel %vm1622, %v1615, %v1619
      %v1624 = vand.u32 2147483647, %v1539
      %vm1625 = vcmp.eq.f32.partialorder %v1624, 8.507059e+37
      %v1626 = vand.u32 %v1539, 2147483648
      %v1627 = vor.u32 1.1754944e-38, %v1626
      %v1628 = vsel %vm1625, %v1627, %v1623
      %v1629 = vmul.f32 %v1474, %v1628
      %v1630 = vrcp.pop %v1542
      %v1631 = vmul.f32 %v1542, %v1630
      %v1632 = vsub.f32 1.0, %v1631
      %v1633 = vmul.f32 %v1630, %v1632
      %v1634 = vadd.f32 %v1630, %v1633
      %vm1635 = vweird.f32 %v1542
      %vm1636 = vweird.f32 %v1630
      %vm1637 = vmor %vm1635, %vm1636
      %v1638 = vsel %vm1637, %v1630, %v1634
      %v1639 = vand.u32 2147483647, %v1542
      %vm1640 = vcmp.eq.f32.partialorder %v1639, 8.507059e+37
      %v1641 = vand.u32 %v1542, 2147483648
      %v1642 = vor.u32 1.1754944e-38, %v1641
      %v1643 = vsel %vm1640, %v1642, %v1638
      %v1644 = vmul.f32 %v1476, %v1643
      %v1645 = vrcp.pop %v1545
      %v1646 = vmul.f32 %v1545, %v1645
      %v1647 = vsub.f32 1.0, %v1646
      %v1648 = vmul.f32 %v1645, %v1647
      %v1649 = vadd.f32 %v1645, %v1648
      %vm1650 = vweird.f32 %v1545
      %vm1651 = vweird.f32 %v1645
      %vm1652 = vmor %vm1650, %vm1651
      %v1653 = vsel %vm1652, %v1645, %v1649
      %v1654 = vand.u32 2147483647, %v1545
      %vm1655 = vcmp.eq.f32.partialorder %v1654, 8.507059e+37
      %v1656 = vand.u32 %v1545, 2147483648
      %v1657 = vor.u32 1.1754944e-38, %v1656
      %v1658 = vsel %vm1655, %v1657, %v1653
      %v1659 = vmul.f32 %v1478, %v1658
      %v1660 = vrcp.pop %v1548
      %v1661 = vmul.f32 %v1548, %v1660
      %v1662 = vsub.f32 1.0, %v1661
      %v1663 = vmul.f32 %v1660, %v1662
      %v1664 = vadd.f32 %v1660, %v1663
      %vm1665 = vweird.f32 %v1548
      %vm1666 = vweird.f32 %v1660
      %vm1667 = vmor %vm1665, %vm1666
      %v1668 = vsel %vm1667, %v1660, %v1664
      %v1669 = vand.u32 2147483647, %v1548
      %vm1670 = vcmp.eq.f32.partialorder %v1669, 8.507059e+37
      %v1671 = vand.u32 %v1548, 2147483648
      %v1672 = vor.u32 1.1754944e-38, %v1671
      %v1673 = vsel %vm1670, %v1672, %v1668
      %v1674 = vmul.f32 %v1480, %v1673
      %v1675 = vrcp.pop %v1551
      %v1676 = vmul.f32 %v1551, %v1675
      %v1677 = vsub.f32 1.0, %v1676
      %v1678 = vmul.f32 %v1675, %v1677
      %v1679 = vadd.f32 %v1675, %v1678
      %vm1680 = vweird.f32 %v1551
      %vm1681 = vweird.f32 %v1675
      %vm1682 = vmor %vm1680, %vm1681
      %v1683 = vsel %vm1682, %v1675, %v1679
      %v1684 = vand.u32 2147483647, %v1551
      %vm1685 = vcmp.eq.f32.partialorder %v1684, 8.507059e+37
      %v1686 = vand.u32 %v1551, 2147483648
      %v1687 = vor.u32 1.1754944e-38, %v1686
      %v1688 = vsel %vm1685, %v1687, %v1683
      %v1689 = vmul.f32 %v1482, %v1688
      %v1690 = vrcp.pop %v1554
      %v1691 = vmul.f32 %v1554, %v1690
      %v1692 = vsub.f32 1.0, %v1691
      %v1693 = vmul.f32 %v1690, %v1692
      %v1694 = vadd.f32 %v1690, %v1693
      %vm1695 = vweird.f32 %v1554
      %vm1696 = vweird.f32 %v1690
      %vm1697 = vmor %vm1695, %vm1696
      %v1698 = vsel %vm1697, %v1690, %v1694
      %v1699 = vand.u32 2147483647, %v1554
      %vm1700 = vcmp.eq.f32.partialorder %v1699, 8.507059e+37
      %v1701 = vand.u32 %v1554, 2147483648
      %v1702 = vor.u32 1.1754944e-38, %v1701
      %v1703 = vsel %vm1700, %v1702, %v1698
      %v1704 = vmul.f32 %v1484, %v1703
      %1715 = vrot.lane.b32.xlu0 %v726, 64
      %v1716 = vpop.permute.xlu0 %1715
      %1717 = vrot.lane.b32.xlu0 %v741, 64
      %v1718 = vpop.permute.xlu0 %1717
      %1719 = vrot.lane.b32.xlu0 %v756, 64
      %v1720 = vpop.permute.xlu0 %1719
      %1721 = vrot.lane.b32.xlu0 %v771, 64
      %v1722 = vpop.permute.xlu0 %1721
      %1723 = vrot.lane.b32.xlu0 %v786, 64
      %v1724 = vpop.permute.xlu0 %1723
      %1725 = vrot.lane.b32.xlu0 %v801, 64
      %v1726 = vpop.permute.xlu0 %1725
      %1727 = vrot.lane.b32.xlu0 %v816, 64
      %v1728 = vpop.permute.xlu0 %1727
      %1729 = vrot.lane.b32.xlu0 %v831, 64
      %v1730 = vpop.permute.xlu0 %1729
      %1731 = vrot.lane.b32.xlu0 %v846, 64
      %v1732 = vpop.permute.xlu0 %1731
      %1733 = vrot.lane.b32.xlu0 %v861, 64
      %v1734 = vpop.permute.xlu0 %1733
      %1755 = vrot.lane.b32.xlu0 %v1007, 64
      %v1756 = vpop.permute.xlu0 %1755
      %1757 = vrot.lane.b32.xlu0 %v1022, 64
      %v1758 = vpop.permute.xlu0 %1757
      %1759 = vrot.lane.b32.xlu0 %v1037, 64
      %v1760 = vpop.permute.xlu0 %1759
      %1761 = vrot.lane.b32.xlu0 %v1052, 64
      %v1762 = vpop.permute.xlu0 %1761
      %1763 = vrot.lane.b32.xlu0 %v1067, 64
      %v1764 = vpop.permute.xlu0 %1763
      %1765 = vrot.lane.b32.xlu0 %v1082, 64
      %v1766 = vpop.permute.xlu0 %1765
      %1767 = vrot.lane.b32.xlu0 %v1097, 64
      %v1768 = vpop.permute.xlu0 %1767
      %1769 = vrot.lane.b32.xlu0 %v1112, 64
      %v1770 = vpop.permute.xlu0 %1769
      %1771 = vrot.lane.b32.xlu0 %v1127, 64
      %v1772 = vpop.permute.xlu0 %1771
      %1773 = vrot.lane.b32.xlu0 %v1142, 64
      %v1774 = vpop.permute.xlu0 %1773
      %1795 = vrot.lane.b32.xlu0 %v1288, 64
      %v1796 = vpop.permute.xlu0 %1795
      %1797 = vrot.lane.b32.xlu0 %v1303, 64
      %v1798 = vpop.permute.xlu0 %1797
      %1799 = vrot.lane.b32.xlu0 %v1318, 64
      %v1800 = vpop.permute.xlu0 %1799
      %1801 = vrot.lane.b32.xlu0 %v1333, 64
      %v1802 = vpop.permute.xlu0 %1801
      %1803 = vrot.lane.b32.xlu0 %v1348, 64
      %v1804 = vpop.permute.xlu0 %1803
      %1805 = vrot.lane.b32.xlu0 %v1363, 64
      %v1806 = vpop.permute.xlu0 %1805
      %1807 = vrot.lane.b32.xlu0 %v1378, 64
      %v1808 = vpop.permute.xlu0 %1807
      %1809 = vrot.lane.b32.xlu0 %v1393, 64
      %v1810 = vpop.permute.xlu0 %1809
      %1811 = vrot.lane.b32.xlu0 %v1408, 64
      %v1812 = vpop.permute.xlu0 %1811
      %1813 = vrot.lane.b32.xlu0 %v1423, 64
      %v1814 = vpop.permute.xlu0 %1813
      %1835 = vrot.lane.b32.xlu0 %v1569, 64
      %v1836 = vpop.permute.xlu0 %1835
      %1837 = vrot.lane.b32.xlu0 %v1584, 64
      %v1838 = vpop.permute.xlu0 %1837
      %1839 = vrot.lane.b32.xlu0 %v1599, 64
      %v1840 = vpop.permute.xlu0 %1839
      %1841 = vrot.lane.b32.xlu0 %v1614, 64
      %v1842 = vpop.permute.xlu0 %1841
      %1843 = vrot.lane.b32.xlu0 %v1629, 64
      %v1844 = vpop.permute.xlu0 %1843
      %1845 = vrot.lane.b32.xlu0 %v1644, 64
      %v1846 = vpop.permute.xlu0 %1845
      %1847 = vrot.lane.b32.xlu0 %v1659, 64
      %v1848 = vpop.permute.xlu0 %1847
      %1849 = vrot.lane.b32.xlu0 %v1674, 64
      %v1850 = vpop.permute.xlu0 %1849
      %1851 = vrot.lane.b32.xlu0 %v1689, 64
      %v1852 = vpop.permute.xlu0 %1851
      %1853 = vrot.lane.b32.xlu0 %v1704, 64
      %v1854 = vpop.permute.xlu0 %1853
      %v1865 = vsel %vm681, %v1716, %v1756
      %v1866 = vsel %vm681, %v1718, %v1758
      %v1867 = vsel %vm681, %v1720, %v1760
      %v1868 = vsel %vm681, %v1722, %v1762
      %v1869 = vsel %vm681, %v1724, %v1764
      %v1870 = vsel %vm681, %v1726, %v1766
      %v1871 = vsel %vm681, %v1728, %v1768
      %v1872 = vsel %vm681, %v1730, %v1770
      %v1873 = vsel %vm681, %v1732, %v1772
      %v1874 = vsel %vm681, %v1734, %v1774
      %vm1875 = vcmask 130048
      %v1876 = vsel %vm1875, %v1865, %v1796
      %v1877 = vsel %vm1875, %v1866, %v1798
      %v1878 = vsel %vm1875, %v1867, %v1800
      %v1879 = vsel %vm1875, %v1868, %v1802
      %v1880 = vsel %vm1875, %v1869, %v1804
      %v1881 = vsel %vm1875, %v1870, %v1806
      %v1882 = vsel %vm1875, %v1871, %v1808
      %v1883 = vsel %vm1875, %v1872, %v1810
      %v1884 = vsel %vm1875, %v1873, %v1812
      %v1885 = vsel %vm1875, %v1874, %v1814
      %vm1886 = vcmask 195584
      %v1887 = vsel %vm1886, %v1876, %v1836
      %v1888 = vsel %vm1886, %v1877, %v1838
      %v1889 = vsel %vm1886, %v1878, %v1840
      %v1890 = vsel %vm1886, %v1879, %v1842
      %v1891 = vsel %vm1886, %v1880, %v1844
      %v1892 = vsel %vm1886, %v1881, %v1846
      %v1893 = vsel %vm1886, %v1882, %v1848
      %v1894 = vsel %vm1886, %v1883, %v1850
      %v1895 = vsel %vm1886, %v1884, %v1852
      %v1896 = vsel %vm1886, %v1885, %v1854
      %1897 = vst.msk [vmem:[%s356] sm:$0xff] %vm396, %v1887
      %1898 = vst.msk [vmem:[%s356 + $0x8] sm:$0xff] %vm396, %v1888
      %1899 = vst.msk [vmem:[%s356 + $0x10] sm:$0xff] %vm396, %v1889
      %1900 = vst.msk [vmem:[%s356 + $0x18] sm:$0xff] %vm396, %v1890
      %1901 = vst.msk [vmem:[%s356 + $0x20] sm:$0xff] %vm396, %v1891
      %1902 = vst.msk [vmem:[%s356 + $0x28] sm:$0xff] %vm396, %v1892
      %1903 = vst.msk [vmem:[%s356 + $0x30] sm:$0xff] %vm396, %v1893
      %1904 = vst.msk [vmem:[%s356 + $0x38] sm:$0xff] %vm396, %v1894
      %1905 = vst.msk [vmem:[%s356 + $0x40] sm:$0xff] %vm396, %v1895
      %1906 = vst.msk [vmem:[%s356 + $0x48] sm:$0xff] %vm396, %v1896
      %s1907 = smul.u32 10, %s20
      %p1908 = scmp.lt.s32.totalorder %s1907, 19
      %s1909 = scalar_select %p1908, %s1907, 19
      %s1910 = smul.addr %s1909, 8
      %s1911 = scalar_lea.vmem %s6, %s1910
      %s1912 = smul.u32 10, %s20
      %p1913 = scmp.lt.s32.totalorder %s1912, 19
      %s1914 = scalar_select %p1913, %s1912, 19
      %s1915 = smul.addr %s1914, 8
      %s1916 = scalar_lea.vmem %s7, %s1915
      %s1917 = smul.u32 10, %s20
      %p1918 = scmp.lt.s32.totalorder %s1917, 19
      %s1919 = scalar_select %p1918, %s1917, 19
      %s1920 = smul.addr %s1919, 8
      %s1921 = scalar_lea.vmem %s8, %s1920
      // Predicated region
      $region45: #{tpu_custom_call.1} parent=43 // pred_check
        %p1922 = pneg %p174
      $region46: #{tpu_custom_call.1} parent=43 // pred_check_branch
        %1924 = sbr.rel (%p1922) target = $region48
      $region47: #{tpu_custom_call.1} parent=43 // pred_region
        %s1925 = smul.u32 10, %s20
      $region48: #{tpu_custom_call.1} parent=43 // pred_fallthru
        _
      // Predicated region
      $region49: #{tpu_custom_call.1} parent=43 // pred_check
        %p1926 = pneg %p200
      $region50: #{tpu_custom_call.1} parent=43 // pred_check_branch
        %1928 = sbr.rel (%p1926) target = $region52
      $region51: #{tpu_custom_call.1} parent=43 // pred_region
        %s1929 = smul.u32 10, %s20
      $region52: #{tpu_custom_call.1} parent=43 // pred_fallthru
        _
      // Predicated region
      $region53: #{tpu_custom_call.1} parent=43 // pred_check
        %p1930 = pneg %p226
      $region54: #{tpu_custom_call.1} parent=43 // pred_check_branch
        %1932 = sbr.rel (%p1930) target = $region56
      $region55: #{tpu_custom_call.1} parent=43 // pred_region
        %s1933 = smul.u32 10, %s20
      $region56: #{tpu_custom_call.1} parent=43 // pred_fallthru
        _
    $region44: #{tpu_custom_call.1} parent=5 // pred_fallthru
      _
    %p1934 = scmp.le.s32.totalorder 2, %s15
    // Predicated region
    $region57: #{tpu_custom_call.1} parent=5 // pred_check
      %p1935 = pneg %p1934
    $region58: #{tpu_custom_call.1} parent=5 // pred_check_branch
      %1937 = sbr.rel (%p1935) target = $region60
    $region59: #{tpu_custom_call.1} parent=5 // pred_region
      %s1938 = ssub.s32 %s15, 2
      // Predicated region
      $region61: #{tpu_custom_call.1} parent=59 // pred_check
        %p1939 = pneg %p180
      $region62: #{tpu_custom_call.1} parent=59 // pred_check_branch
        %1941 = sbr.rel (%p1939) target = $region64
      $region63: #{tpu_custom_call.1} parent=59 // pred_region
        %s1942 = smul.u32 10, %s21
        %p1943 = scmp.lt.s32.totalorder %s1942, 19
        %s1944 = scalar_select %p1943, %s1942, 19
        %s1945 = smul.addr %s1944, 8
        %s1946 = scalar_lea.vmem %s6, %s1945
      $region64: #{tpu_custom_call.1} parent=59 // pred_fallthru
        _
      // Predicated region
      $region65: #{tpu_custom_call.1} parent=59 // pred_check
        %p1947 = pneg %p206
      $region66: #{tpu_custom_call.1} parent=59 // pred_check_branch
        %1949 = sbr.rel (%p1947) target = $region68
      $region67: #{tpu_custom_call.1} parent=59 // pred_region
        %s1950 = smul.u32 10, %s21
        %p1951 = scmp.lt.s32.totalorder %s1950, 19
        %s1952 = scalar_select %p1951, %s1950, 19
        %s1953 = smul.addr %s1952, 8
        %s1954 = scalar_lea.vmem %s7, %s1953
      $region68: #{tpu_custom_call.1} parent=59 // pred_fallthru
        _
      // Predicated region
      $region69: #{tpu_custom_call.1} parent=59 // pred_check
        %p1955 = pneg %p232
      $region70: #{tpu_custom_call.1} parent=59 // pred_check_branch
        %1957 = sbr.rel (%p1955) target = $region72
      $region71: #{tpu_custom_call.1} parent=59 // pred_region
        %s1958 = smul.u32 10, %s21
        %p1959 = scmp.lt.s32.totalorder %s1958, 19
        %s1960 = scalar_select %p1959, %s1958, 19
        %s1961 = smul.addr %s1960, 8
        %s1962 = scalar_lea.vmem %s8, %s1961
      $region72: #{tpu_custom_call.1} parent=59 // pred_fallthru
        _
    $region60: #{tpu_custom_call.1} parent=5 // pred_fallthru
      _
  $region6: #{tpu_custom_call.1} parent=0 // loop_footer
    %s19 = sadd.s32 1, %s15
  $region7: #{tpu_custom_call.1} parent=0 // loop_footer_branch
    %14 = sbr.rel target = $region3
  $region8: #{tpu_custom_call.1} parent=0 // loop_exit
    _

</llo_original>
